<compile_context>
chip_gen: v5e
topology: v5e:2x2
jax: 0.10.0
libtpu: 0.0.40
codegen_flags: <defaults>
</compile_context>

<pallas_src>
import functools

import jax
import jax.numpy as jnp
from jax import lax
from jax.experimental import pallas as pl
from jax.experimental.pallas import tpu as pltpu


def _round_up(x, m):
    return ((x + m - 1) // m) * m


def lstm_recurrence_kernel(xproj_ref, len_ref, w_hh0_ref, w_ih1_ref, w_hh1_ref,
                           b1_ref, hlast_ref, h0_ref, c0_ref, h1_ref, c1_ref):
    TC, BB, G = xproj_ref.shape                  # time chunk, batch block, 4H
    H = w_hh0_ref.shape[0]
    t_chunk = pl.program_id(1)

    # Reset recurrent state (and the resident h_last output block) at the start of each
    # batch block's time sweep.
    @pl.when(t_chunk == 0)
    def _init():
        z = jnp.zeros((BB, H), jnp.float32)
        h0_ref[...] = z
        c0_ref[...] = z
        h1_ref[...] = z
        c1_ref[...] = z
        hlast_ref[...] = z

    lengths = len_ref[...]                       # [BB, 1] int32

    # Hoisted loop-invariant loads / broadcasts (stay resident across the time loop).
    w_hh0 = w_hh0_ref[...]                       # [H, 4H]  bf16
    w_ih1 = w_ih1_ref[...]                       # [H, 4H]  bf16
    w_hh1 = w_hh1_ref[...]                       # [H, 4H]  bf16
    b1_b = jnp.broadcast_to(b1_ref[...], (BB, G))  # [BB, 4H] f32 (hoisted broadcast)
    t_base = t_chunk * TC

    def gates(g, c):
        # Lane-dense nonlinearities over the full 4H (=128) lanes: 2 EUP passes
        # instead of 4 masked sub-lane ones, then static per-gate slices
        # (PyTorch gate order i, f, g, o).
        sig = jax.nn.sigmoid(g)
        th = jnp.tanh(g)
        i = sig[:, 0:H]
        f = sig[:, H:2 * H]
        gg = th[:, 2 * H:3 * H]
        o = sig[:, 3 * H:4 * H]
        c_new = f * c + i * gg
        return o * jnp.tanh(c_new), c_new

    def step(t, carry):
        h0, c0, h1, c1, h_last = carry
        # Layer 1's recurrent matmul does NOT depend on layer 0's output this step:
        # issue it first so it overlaps with layer 0's gate (EUP) work.
        g1_hh = jnp.dot(h1.astype(jnp.bfloat16), w_hh1,
                        preferred_element_type=jnp.float32)
        # Layer 0: input projection is a precomputed table row -> single matmul.
        g0 = xproj_ref[t].astype(jnp.float32) + jnp.dot(
            h0.astype(jnp.bfloat16), w_hh0, preferred_element_type=jnp.float32)
        h0n, c0n = gates(g0, c0)
        # TODO(synk): nn.LSTM inter-layer dropout(p=0.1) applies only in train mode;
        # eval-mode (no dropout) semantics are implemented here.
        g1 = jnp.dot(h0n.astype(jnp.bfloat16), w_ih1,
                     preferred_element_type=jnp.float32) + g1_hh + b1_b
        h1n, c1n = gates(g1, c1)
        # Packed-sequence hidden[-1]: capture layer-1 h at global t == length - 1.
        take = lengths == (t_base + t + 1)
        return h0n, c0n, h1n, c1n, jnp.where(take, h1n, h_last)

    carry = (h0_ref[...], c0_ref[...], h1_ref[...], c1_ref[...], hlast_ref[...])
    # Partial unroll: lets the scheduler interleave MXU/EUP/VPU work across a few steps
    # without blowing compile time or vreg live ranges over the whole chunk.
    unroll = min(8, TC)
    h0, c0, h1, c1, h_last = lax.fori_loop(0, TC, step, carry, unroll=unroll)
    h0_ref[...] = h0
    c0_ref[...] = c0
    h1_ref[...] = h1
    c1_ref[...] = c1
    hlast_ref[...] = h_last                      # resident across the "arbitrary" t axis


@functools.partial(jax.jit, static_argnames=("batch_block", "time_chunk"))
def lstm_packed_forward(x_tokens, lengths, params, *, batch_block=None, time_chunk=None):
    emb = params["embedding"]                                    # [13, E]
    B, T = x_tokens.shape
    H = params["w_hh0"].shape[0]
    G = 4 * H

    # ---- glue (plain JAX): fold layer-0 input projection into a tiny [13, 4H] table ----
    emb_proj = (emb @ params["w_ih0"] + params["b0"]).astype(jnp.bfloat16)   # [13, 4H]

    # Tiling defaults (generation-safe: every block is <= ~1 MiB).
    if batch_block is None:
        batch_block = min(_round_up(B, 16), 128)
    BB = batch_block
    B_pad = _round_up(B, BB)
    nb = B_pad // BB
    if time_chunk is None:
        time_chunk = min(32, _round_up(T, 8))
    TC = time_chunk
    T_pad = _round_up(T, TC)
    nt = T_pad // TC

    tok = x_tokens.astype(jnp.int32)
    if B_pad != B or T_pad != T:
        tok = jnp.pad(tok, ((0, B_pad - B), (0, T_pad - T)))     # pad token id 0 is valid
    lengths = lengths.astype(jnp.int32)
    if B_pad != B:
        lengths = jnp.pad(lengths, (0, B_pad - B), constant_values=1)
    lengths2d = lengths.reshape(B_pad, 1)

    # Time-major gather of the projection table (replaces the old embedding gather,
    # [B,T,E] intermediate and the whole input-projection pallas_call).
    tok_tm = tok.T                                               # [T_pad, B_pad]
    xproj = jnp.take(emb_proj, tok_tm, axis=0)                   # [T_pad, B_pad, 4H] bf16

    # bf16 operands for the recurrent MXU matmuls (state & gate math stay f32).
    w_hh0_bf = params["w_hh0"].astype(jnp.bfloat16)              # [H, 4H]
    w_ih1_bf = params["w_ih1"].astype(jnp.bfloat16)              # [H, 4H]
    w_hh1_bf = params["w_hh1"].astype(jnp.bfloat16)              # [H, 4H]

    # ---- Pallas kernel: 2-layer recurrence on a (batch-parallel, time-chunked) grid ----
    h_last = pl.pallas_call(
        lstm_recurrence_kernel,
        out_shape=jax.ShapeDtypeStruct((B_pad, H), jnp.float32),
        grid_spec=pltpu.PrefetchScalarGridSpec(
            num_scalar_prefetch=0,
            grid=(nb, nt),
            in_specs=[pl.BlockSpec((TC, BB, G), lambda b, t: (t, b, 0)),   # xproj (bf16)
                      pl.BlockSpec((BB, 1), lambda b, t: (b, 0)),          # lengths
                      pl.BlockSpec((H, G), lambda b, t: (0, 0)),           # w_hh0
                      pl.BlockSpec((H, G), lambda b, t: (0, 0)),           # w_ih1
                      pl.BlockSpec((H, G), lambda b, t: (0, 0)),           # w_hh1
                      pl.BlockSpec((1, G), lambda b, t: (0, 0))],          # b1
            out_specs=pl.BlockSpec((BB, H), lambda b, t: (b, 0)),          # h_last
            scratch_shapes=[pltpu.VMEM((BB, H), jnp.float32)] * 4),        # h0,c0,h1,c1
        compiler_params=pltpu.CompilerParams(
            dimension_semantics=("parallel", "arbitrary")),
    )(xproj, lengths2d, w_hh0_bf, w_ih1_bf, w_hh1_bf, params["b1"])

    # Final FC in plain JAX: kernel output stays lane-dense, the [H,1] matmul is tiny.
    return h_last[:B] @ params["fc_w"] + params["fc_b"]


def init_params(key, embd_size, hidden_size):
    E, H = embd_size, hidden_size
    ks = jax.random.split(key, 11)
    s = 1.0 / float(jnp.sqrt(H))

    def u(k, shape, scale):
        return jax.random.uniform(k, shape, jnp.float32, -scale, scale)

    emb = jax.random.normal(ks[0], (13, E), jnp.float32)        # nn.Embedding default N(0,1)
    w_ih0 = u(ks[1], (4 * H, E), s)                             # PyTorch layout [4H, in]
    w_hh0 = u(ks[2], (4 * H, H), s)
    b_ih0 = u(ks[3], (4 * H,), s)
    b_hh0 = u(ks[4], (4 * H,), s)
    w_ih1 = u(ks[5], (4 * H, H), s)
    w_hh1 = u(ks[6], (4 * H, H), s)
    b_ih1 = u(ks[7], (4 * H,), s)
    b_hh1 = u(ks[8], (4 * H,), s)
    fc_w = u(ks[9], (1, H), s)
    fc_b = u(ks[10], (1,), s)

    return dict(
        embedding=emb,
        w_ih0=w_ih0.T, w_hh0=w_hh0.T, b0=(b_ih0 + b_hh0)[None, :],
        w_ih1=w_ih1.T, w_hh1=w_hh1.T, b1=(b_ih1 + b_hh1)[None, :],
        fc_w=fc_w.T, fc_b=fc_b[None, :],
    )


def reference_forward(x_tokens, lengths, params):
    # Pure-JAX f32 reference matching PyTorch eval-mode LSTM_packed.forward semantics.
    emb = jnp.take(params["embedding"], x_tokens.astype(jnp.int32), axis=0)
    B, T, _ = emb.shape
    H = params["w_hh0"].shape[0]

    def cell(x_t, h, c, w_ih, w_hh, b):
        g = x_t @ w_ih + h @ w_hh + b
        i = jax.nn.sigmoid(g[:, :H])
        f = jax.nn.sigmoid(g[:, H:2 * H])
        gg = jnp.tanh(g[:, 2 * H:3 * H])
        o = jax.nn.sigmoid(g[:, 3 * H:])
        c = f * c + i * gg
        return o * jnp.tanh(c), c

    h0 = c0 = h1 = c1 = jnp.zeros((B, H), jnp.float32)
    h_last = jnp.zeros((B, H), jnp.float32)
    for t in range(T):
        h0, c0 = cell(emb[:, t], h0, c0, params["w_ih0"], params["w_hh0"], params["b0"])
        h1, c1 = cell(h0, h1, c1, params["w_ih1"], params["w_hh1"], params["b1"])
        h_last = jnp.where(lengths.reshape(B, 1) == t + 1, h1, h_last)
    return h_last @ params["fc_w"] + params["fc_b"]


if __name__ == "__main__":
    EMBD, HIDDEN, B, T = 16, 32, 2, 8
    key = jax.random.PRNGKey(0)
    kp, kx = jax.random.split(key)

    params = init_params(kp, EMBD, HIDDEN)
    x_tokens = jax.random.randint(kx, (B, T), 0, 13, dtype=jnp.int32)   # token ids in [0, 13)
    lengths = jnp.array([5, 8], dtype=jnp.int32)                        # lengths must be in [1, T]

    out = lstm_packed_forward(x_tokens, lengths, params)
    out = jax.block_until_ready(out)

    ref = reference_forward(x_tokens, lengths, params)
    assert out.shape == (B, 1), out.shape
    # Recurrent matmul operands and the streamed input-projection table are bf16
    # (f32 state/accumulate), so compare against the pure-f32 reference with a
    # bf16-appropriate tolerance.
    assert jnp.allclose(out, ref, atol=2e-2, rtol=2e-2), (out, ref)

    print("KERNEL_OK")
</pallas_src>

<mosaic_0001>
module attributes {stable_mosaic.version = 11 : i64} {
  func.func @lstm_recurrence_kernel(%arg0: i32, %arg1: i32, %arg2: memref<8x16x128xbf16, #tpu.memory_space<vmem>>, %arg3: memref<16x1xi32, #tpu.memory_space<vmem>>, %arg4: memref<32x128xbf16, #tpu.memory_space<vmem>>, %arg5: memref<32x128xbf16, #tpu.memory_space<vmem>>, %arg6: memref<32x128xbf16, #tpu.memory_space<vmem>>, %arg7: memref<1x128xf32, #tpu.memory_space<vmem>>, %arg8: memref<16x32xf32, #tpu.memory_space<vmem>>, %arg9: memref<16x32xf32, #tpu.memory_space<vmem>>, %arg10: memref<16x32xf32, #tpu.memory_space<vmem>>, %arg11: memref<16x32xf32, #tpu.memory_space<vmem>>, %arg12: memref<16x32xf32, #tpu.memory_space<vmem>>) attributes {dimension_semantics = [#tpu.dimension_semantics<parallel>, #tpu.dimension_semantics<arbitrary>], iteration_bounds = array<i64: 1, 1>, scalar_prefetch = 0 : i64, scratch_operands = 4 : i64, tpu.core_type = #tpu.core_type<tc>, window_params = [{transform_indices = @transform_0, window_bounds = array<i64: 8, 16, 128>}, {transform_indices = @transform_1, window_bounds = array<i64: 16, 1>}, {pipeline_mode = #tpu.pipeline_mode<synchronous>, transform_indices = @transform_2, window_bounds = array<i64: 32, 128>}, {pipeline_mode = #tpu.pipeline_mode<synchronous>, transform_indices = @transform_3, window_bounds = array<i64: 32, 128>}, {pipeline_mode = #tpu.pipeline_mode<synchronous>, transform_indices = @transform_4, window_bounds = array<i64: 32, 128>}, {pipeline_mode = #tpu.pipeline_mode<synchronous>, transform_indices = @transform_5, window_bounds = array<i64: 1, 128>}, {transform_indices = @transform_6, window_bounds = array<i64: 16, 32>}]} {
    %c0_i32 = arith.constant 0 : i32
    %0 = arith.cmpi eq, %arg1, %c0_i32 : i32
    %1 = arith.extui %0 : i1 to i32
    %c0_i32_0 = arith.constant 0 : i32
    %2 = arith.cmpi ne, %1, %c0_i32_0 : i32
    scf.if %2 {
      %cst_95 = arith.constant 0.000000e+00 : f32
      %421 = vector.broadcast %cst_95 : f32 to vector<16x32xf32>
      %c0_96 = arith.constant 0 : index
      %c0_97 = arith.constant 0 : index
      %422 = vector.load %arg9[%c0_96, %c0_97] : memref<16x32xf32, #tpu.memory_space<vmem>>, vector<16x32xf32>
      tpu.vector_store %arg9[%c0_96, %c0_97], %421 {strides = array<i32>} : memref<16x32xf32, #tpu.memory_space<vmem>>, vector<16x32xf32>,
      %c0_98 = arith.constant 0 : index
      %c0_99 = arith.constant 0 : index
      %423 = vector.load %arg10[%c0_98, %c0_99] : memref<16x32xf32, #tpu.memory_space<vmem>>, vector<16x32xf32>
      tpu.vector_store %arg10[%c0_98, %c0_99], %421 {strides = array<i32>} : memref<16x32xf32, #tpu.memory_space<vmem>>, vector<16x32xf32>,
      %c0_100 = arith.constant 0 : index
      %c0_101 = arith.constant 0 : index
      %424 = vector.load %arg11[%c0_100, %c0_101] : memref<16x32xf32, #tpu.memory_space<vmem>>, vector<16x32xf32>
      tpu.vector_store %arg11[%c0_100, %c0_101], %421 {strides = array<i32>} : memref<16x32xf32, #tpu.memory_space<vmem>>, vector<16x32xf32>,
      %c0_102 = arith.constant 0 : index
      %c0_103 = arith.constant 0 : index
      %425 = vector.load %arg12[%c0_102, %c0_103] : memref<16x32xf32, #tpu.memory_space<vmem>>, vector<16x32xf32>
      tpu.vector_store %arg12[%c0_102, %c0_103], %421 {strides = array<i32>} : memref<16x32xf32, #tpu.memory_space<vmem>>, vector<16x32xf32>,
      %c0_104 = arith.constant 0 : index
      %c0_105 = arith.constant 0 : index
      %426 = vector.load %arg8[%c0_104, %c0_105] : memref<16x32xf32, #tpu.memory_space<vmem>>, vector<16x32xf32>
      tpu.vector_store %arg8[%c0_104, %c0_105], %421 {strides = array<i32>} : memref<16x32xf32, #tpu.memory_space<vmem>>, vector<16x32xf32>,
    } else {
    }
    %c0 = arith.constant 0 : index
    %c0_1 = arith.constant 0 : index
    %3 = vector.load %arg3[%c0, %c0_1] : memref<16x1xi32, #tpu.memory_space<vmem>>, vector<16x1xi32>
    %c0_2 = arith.constant 0 : index
    %c0_3 = arith.constant 0 : index
    %4 = vector.load %arg4[%c0_2, %c0_3] : memref<32x128xbf16, #tpu.memory_space<vmem>>, vector<32x128xbf16>
    %c0_4 = arith.constant 0 : index
    %c0_5 = arith.constant 0 : index
    %5 = vector.load %arg5[%c0_4, %c0_5] : memref<32x128xbf16, #tpu.memory_space<vmem>>, vector<32x128xbf16>
    %c0_6 = arith.constant 0 : index
    %c0_7 = arith.constant 0 : index
    %6 = vector.load %arg6[%c0_6, %c0_7] : memref<32x128xbf16, #tpu.memory_space<vmem>>, vector<32x128xbf16>
    %c0_8 = arith.constant 0 : index
    %c0_9 = arith.constant 0 : index
    %7 = vector.load %arg7[%c0_8, %c0_9] : memref<1x128xf32, #tpu.memory_space<vmem>>, vector<1x128xf32>
    %8 = vector.shape_cast %7 : vector<1x128xf32> to vector<1x128xf32>
    %9 = vector.broadcast %8 : vector<1x128xf32> to vector<16x128xf32>
    %c8_i32 = arith.constant 8 : i32
    %10 = arith.muli %arg1, %c8_i32 : i32
    %c0_10 = arith.constant 0 : index
    %c0_11 = arith.constant 0 : index
    %11 = vector.load %arg9[%c0_10, %c0_11] : memref<16x32xf32, #tpu.memory_space<vmem>>, vector<16x32xf32>
    %c0_12 = arith.constant 0 : index
    %c0_13 = arith.constant 0 : index
    %12 = vector.load %arg10[%c0_12, %c0_13] : memref<16x32xf32, #tpu.memory_space<vmem>>, vector<16x32xf32>
    %c0_14 = arith.constant 0 : index
    %c0_15 = arith.constant 0 : index
    %13 = vector.load %arg11[%c0_14, %c0_15] : memref<16x32xf32, #tpu.memory_space<vmem>>, vector<16x32xf32>
    %c0_16 = arith.constant 0 : index
    %c0_17 = arith.constant 0 : index
    %14 = vector.load %arg12[%c0_16, %c0_17] : memref<16x32xf32, #tpu.memory_space<vmem>>, vector<16x32xf32>
    %c0_18 = arith.constant 0 : index
    %c0_19 = arith.constant 0 : index
    %15 = vector.load %arg8[%c0_18, %c0_19] : memref<16x32xf32, #tpu.memory_space<vmem>>, vector<16x32xf32>
    %c0_i32_20 = arith.constant 0 : i32
    %16 = arith.truncf %13 : vector<16x32xf32> to vector<16x32xbf16>
    %cst = arith.constant dense<0.000000e+00> : vector<16x128xf32>
    %17 = tpu.matmul %16, %6, %cst {dimension_numbers = #tpu.dot_dimension_numbers<[1], [0], [0], [1], [0, 0, 1, 1], [], []>} : vector<16x32xbf16>, vector<32x128xbf16>, vector<16x128xf32> -> vector<16x128xf32>
    %18 = arith.index_cast %c0_i32_20 : i32 to index
    %c0_21 = arith.constant 0 : index
    %c0_22 = arith.constant 0 : index
    %19 = vector.load %arg2[%18, %c0_21, %c0_22] : memref<8x16x128xbf16, #tpu.memory_space<vmem>>, vector<1x16x128xbf16>
    %20 = vector.shape_cast %19 : vector<1x16x128xbf16> to vector<16x128xbf16>
    %21 = arith.extf %20 : vector<16x128xbf16> to vector<16x128xf32>
    %22 = arith.truncf %11 : vector<16x32xf32> to vector<16x32xbf16>
    %cst_23 = arith.constant dense<0.000000e+00> : vector<16x128xf32>
    %23 = tpu.matmul %22, %4, %cst_23 {dimension_numbers = #tpu.dot_dimension_numbers<[1], [0], [0], [1], [0, 0, 1, 1], [], []>} : vector<16x32xbf16>, vector<32x128xbf16>, vector<16x128xf32> -> vector<16x128xf32>
    %24 = arith.addf %21, %23 : vector<16x128xf32>
    %25 = arith.negf %24 : vector<16x128xf32>
    %26 = math.exp %25 : vector<16x128xf32>
    %cst_24 = arith.constant 1.000000e+00 : f32
    %27 = vector.broadcast %cst_24 : f32 to vector<16x128xf32>
    %28 = arith.addf %27, %26 : vector<16x128xf32>
    %29 = arith.divf %27, %28 : vector<16x128xf32>
    %30 = math.tanh %24 : vector<16x128xf32>
    %31 = vector.extract_strided_slice %29 {offsets = [0, 0], sizes = [16, 32], strides = [1, 1]} : vector<16x128xf32> to vector<16x32xf32>
    %32 = vector.extract_strided_slice %29 {offsets = [0, 32], sizes = [16, 32], strides = [1, 1]} : vector<16x128xf32> to vector<16x32xf32>
    %33 = vector.extract_strided_slice %30 {offsets = [0, 64], sizes = [16, 32], strides = [1, 1]} : vector<16x128xf32> to vector<16x32xf32>
    %34 = vector.extract_strided_slice %29 {offsets = [0, 96], sizes = [16, 32], strides = [1, 1]} : vector<16x128xf32> to vector<16x32xf32>
    %35 = arith.mulf %32, %12 : vector<16x32xf32>
    %36 = arith.mulf %31, %33 : vector<16x32xf32>
    %37 = arith.addf %35, %36 : vector<16x32xf32>
    %38 = math.tanh %37 : vector<16x32xf32>
    %39 = arith.mulf %34, %38 : vector<16x32xf32>
    %40 = arith.truncf %39 : vector<16x32xf32> to vector<16x32xbf16>
    %cst_25 = arith.constant dense<0.000000e+00> : vector<16x128xf32>
    %41 = tpu.matmul %40, %5, %cst_25 {dimension_numbers = #tpu.dot_dimension_numbers<[1], [0], [0], [1], [0, 0, 1, 1], [], []>} : vector<16x32xbf16>, vector<32x128xbf16>, vector<16x128xf32> -> vector<16x128xf32>
    %42 = arith.addf %41, %17 : vector<16x128xf32>
    %43 = arith.addf %42, %9 : vector<16x128xf32>
    %44 = arith.negf %43 : vector<16x128xf32>
    %45 = math.exp %44 : vector<16x128xf32>
    %cst_26 = arith.constant 1.000000e+00 : f32
    %46 = vector.broadcast %cst_26 : f32 to vector<16x128xf32>
    %47 = arith.addf %46, %45 : vector<16x128xf32>
    %48 = arith.divf %46, %47 : vector<16x128xf32>
    %49 = math.tanh %43 : vector<16x128xf32>
    %50 = vector.extract_strided_slice %48 {offsets = [0, 0], sizes = [16, 32], strides = [1, 1]} : vector<16x128xf32> to vector<16x32xf32>
    %51 = vector.extract_strided_slice %48 {offsets = [0, 32], sizes = [16, 32], strides = [1, 1]} : vector<16x128xf32> to vector<16x32xf32>
    %52 = vector.extract_strided_slice %49 {offsets = [0, 64], sizes = [16, 32], strides = [1, 1]} : vector<16x128xf32> to vector<16x32xf32>
    %53 = vector.extract_strided_slice %48 {offsets = [0, 96], sizes = [16, 32], strides = [1, 1]} : vector<16x128xf32> to vector<16x32xf32>
    %54 = arith.mulf %51, %14 : vector<16x32xf32>
    %55 = arith.mulf %50, %52 : vector<16x32xf32>
    %56 = arith.addf %54, %55 : vector<16x32xf32>
    %57 = math.tanh %56 : vector<16x32xf32>
    %58 = arith.mulf %53, %57 : vector<16x32xf32>
    %59 = arith.addi %10, %c0_i32_20 : i32
    %c1_i32 = arith.constant 1 : i32
    %60 = arith.addi %59, %c1_i32 : i32
    %61 = vector.broadcast %60 : i32 to vector<16x1xi32>
    %62 = arith.cmpi eq, %3, %61 : vector<16x1xi32>
    %63 = vector.shape_cast %62 : vector<16x1xi1> to vector<16x1xi1>
    %64 = vector.broadcast %63 : vector<16x1xi1> to vector<16x32xi1>
    %65 = arith.select %64, %58, %15 : vector<16x32xi1>, vector<16x32xf32>
    %c1_i32_27 = arith.constant 1 : i32
    %66 = arith.truncf %58 : vector<16x32xf32> to vector<16x32xbf16>
    %cst_28 = arith.constant dense<0.000000e+00> : vector<16x128xf32>
    %67 = tpu.matmul %66, %6, %cst_28 {dimension_numbers = #tpu.dot_dimension_numbers<[1], [0], [0], [1], [0, 0, 1, 1], [], []>} : vector<16x32xbf16>, vector<32x128xbf16>, vector<16x128xf32> -> vector<16x128xf32>
    %68 = arith.index_cast %c1_i32_27 : i32 to index
    %c0_29 = arith.constant 0 : index
    %c0_30 = arith.constant 0 : index
    %69 = vector.load %arg2[%68, %c0_29, %c0_30] : memref<8x16x128xbf16, #tpu.memory_space<vmem>>, vector<1x16x128xbf16>
    %70 = vector.shape_cast %69 : vector<1x16x128xbf16> to vector<16x128xbf16>
    %71 = arith.extf %70 : vector<16x128xbf16> to vector<16x128xf32>
    %72 = arith.truncf %39 : vector<16x32xf32> to vector<16x32xbf16>
    %cst_31 = arith.constant dense<0.000000e+00> : vector<16x128xf32>
    %73 = tpu.matmul %72, %4, %cst_31 {dimension_numbers = #tpu.dot_dimension_numbers<[1], [0], [0], [1], [0, 0, 1, 1], [], []>} : vector<16x32xbf16>, vector<32x128xbf16>, vector<16x128xf32> -> vector<16x128xf32>
    %74 = arith.addf %71, %73 : vector<16x128xf32>
    %75 = arith.negf %74 : vector<16x128xf32>
    %76 = math.exp %75 : vector<16x128xf32>
    %cst_32 = arith.constant 1.000000e+00 : f32
    %77 = vector.broadcast %cst_32 : f32 to vector<16x128xf32>
    %78 = arith.addf %77, %76 : vector<16x128xf32>
    %79 = arith.divf %77, %78 : vector<16x128xf32>
    %80 = math.tanh %74 : vector<16x128xf32>
    %81 = vector.extract_strided_slice %79 {offsets = [0, 0], sizes = [16, 32], strides = [1, 1]} : vector<16x128xf32> to vector<16x32xf32>
    %82 = vector.extract_strided_slice %79 {offsets = [0, 32], sizes = [16, 32], strides = [1, 1]} : vector<16x128xf32> to vector<16x32xf32>
    %83 = vector.extract_strided_slice %80 {offsets = [0, 64], sizes = [16, 32], strides = [1, 1]} : vector<16x128xf32> to vector<16x32xf32>
    %84 = vector.extract_strided_slice %79 {offsets = [0, 96], sizes = [16, 32], strides = [1, 1]} : vector<16x128xf32> to vector<16x32xf32>
    %85 = arith.mulf %82, %37 : vector<16x32xf32>
    %86 = arith.mulf %81, %83 : vector<16x32xf32>
    %87 = arith.addf %85, %86 : vector<16x32xf32>
    %88 = math.tanh %87 : vector<16x32xf32>
    %89 = arith.mulf %84, %88 : vector<16x32xf32>
    %90 = arith.truncf %89 : vector<16x32xf32> to vector<16x32xbf16>
    %cst_33 = arith.constant dense<0.000000e+00> : vector<16x128xf32>
    %91 = tpu.matmul %90, %5, %cst_33 {dimension_numbers = #tpu.dot_dimension_numbers<[1], [0], [0], [1], [0, 0, 1, 1], [], []>} : vector<16x32xbf16>, vector<32x128xbf16>, vector<16x128xf32> -> vector<16x128xf32>
    %92 = arith.addf %91, %67 : vector<16x128xf32>
    %93 = arith.addf %92, %9 : vector<16x128xf32>
    %94 = arith.negf %93 : vector<16x128xf32>
    %95 = math.exp %94 : vector<16x128xf32>
    %cst_34 = arith.constant 1.000000e+00 : f32
    %96 = vector.broadcast %cst_34 : f32 to vector<16x128xf32>
    %97 = arith.addf %96, %95 : vector<16x128xf32>
    %98 = arith.divf %96, %97 : vector<16x128xf32>
    %99 = math.tanh %93 : vector<16x128xf32>
    %100 = vector.extract_strided_slice %98 {offsets = [0, 0], sizes = [16, 32], strides = [1, 1]} : vector<16x128xf32> to vector<16x32xf32>
    %101 = vector.extract_strided_slice %98 {offsets = [0, 32], sizes = [16, 32], strides = [1, 1]} : vector<16x128xf32> to vector<16x32xf32>
    %102 = vector.extract_strided_slice %99 {offsets = [0, 64], sizes = [16, 32], strides = [1, 1]} : vector<16x128xf32> to vector<16x32xf32>
    %103 = vector.extract_strided_slice %98 {offsets = [0, 96], sizes = [16, 32], strides = [1, 1]} : vector<16x128xf32> to vector<16x32xf32>
    %104 = arith.mulf %101, %56 : vector<16x32xf32>
    %105 = arith.mulf %100, %102 : vector<16x32xf32>
    %106 = arith.addf %104, %105 : vector<16x32xf32>
    %107 = math.tanh %106 : vector<16x32xf32>
    %108 = arith.mulf %103, %107 : vector<16x32xf32>
    %109 = arith.addi %10, %c1_i32_27 : i32
    %c1_i32_35 = arith.constant 1 : i32
    %110 = arith.addi %109, %c1_i32_35 : i32
    %111 = vector.broadcast %110 : i32 to vector<16x1xi32>
    %112 = arith.cmpi eq, %3, %111 : vector<16x1xi32>
    %113 = vector.shape_cast %112 : vector<16x1xi1> to vector<16x1xi1>
    %114 = vector.broadcast %113 : vector<16x1xi1> to vector<16x32xi1>
    %115 = arith.select %114, %108, %65 : vector<16x32xi1>, vector<16x32xf32>
    %c2_i32 = arith.constant 2 : i32
    %116 = arith.truncf %108 : vector<16x32xf32> to vector<16x32xbf16>
    %cst_36 = arith.constant dense<0.000000e+00> : vector<16x128xf32>
    %117 = tpu.matmul %116, %6, %cst_36 {dimension_numbers = #tpu.dot_dimension_numbers<[1], [0], [0], [1], [0, 0, 1, 1], [], []>} : vector<16x32xbf16>, vector<32x128xbf16>, vector<16x128xf32> -> vector<16x128xf32>
    %118 = arith.index_cast %c2_i32 : i32 to index
    %c0_37 = arith.constant 0 : index
    %c0_38 = arith.constant 0 : index
    %119 = vector.load %arg2[%118, %c0_37, %c0_38] : memref<8x16x128xbf16, #tpu.memory_space<vmem>>, vector<1x16x128xbf16>
    %120 = vector.shape_cast %119 : vector<1x16x128xbf16> to vector<16x128xbf16>
    %121 = arith.extf %120 : vector<16x128xbf16> to vector<16x128xf32>
    %122 = arith.truncf %89 : vector<16x32xf32> to vector<16x32xbf16>
    %cst_39 = arith.constant dense<0.000000e+00> : vector<16x128xf32>
    %123 = tpu.matmul %122, %4, %cst_39 {dimension_numbers = #tpu.dot_dimension_numbers<[1], [0], [0], [1], [0, 0, 1, 1], [], []>} : vector<16x32xbf16>, vector<32x128xbf16>, vector<16x128xf32> -> vector<16x128xf32>
    %124 = arith.addf %121, %123 : vector<16x128xf32>
    %125 = arith.negf %124 : vector<16x128xf32>
    %126 = math.exp %125 : vector<16x128xf32>
    %cst_40 = arith.constant 1.000000e+00 : f32
    %127 = vector.broadcast %cst_40 : f32 to vector<16x128xf32>
    %128 = arith.addf %127, %126 : vector<16x128xf32>
    %129 = arith.divf %127, %128 : vector<16x128xf32>
    %130 = math.tanh %124 : vector<16x128xf32>
    %131 = vector.extract_strided_slice %129 {offsets = [0, 0], sizes = [16, 32], strides = [1, 1]} : vector<16x128xf32> to vector<16x32xf32>
    %132 = vector.extract_strided_slice %129 {offsets = [0, 32], sizes = [16, 32], strides = [1, 1]} : vector<16x128xf32> to vector<16x32xf32>
    %133 = vector.extract_strided_slice %130 {offsets = [0, 64], sizes = [16, 32], strides = [1, 1]} : vector<16x128xf32> to vector<16x32xf32>
    %134 = vector.extract_strided_slice %129 {offsets = [0, 96], sizes = [16, 32], strides = [1, 1]} : vector<16x128xf32> to vector<16x32xf32>
    %135 = arith.mulf %132, %87 : vector<16x32xf32>
    %136 = arith.mulf %131, %133 : vector<16x32xf32>
    %137 = arith.addf %135, %136 : vector<16x32xf32>
    %138 = math.tanh %137 : vector<16x32xf32>
    %139 = arith.mulf %134, %138 : vector<16x32xf32>
    %140 = arith.truncf %139 : vector<16x32xf32> to vector<16x32xbf16>
    %cst_41 = arith.constant dense<0.000000e+00> : vector<16x128xf32>
    %141 = tpu.matmul %140, %5, %cst_41 {dimension_numbers = #tpu.dot_dimension_numbers<[1], [0], [0], [1], [0, 0, 1, 1], [], []>} : vector<16x32xbf16>, vector<32x128xbf16>, vector<16x128xf32> -> vector<16x128xf32>
    %142 = arith.addf %141, %117 : vector<16x128xf32>
    %143 = arith.addf %142, %9 : vector<16x128xf32>
    %144 = arith.negf %143 : vector<16x128xf32>
    %145 = math.exp %144 : vector<16x128xf32>
    %cst_42 = arith.constant 1.000000e+00 : f32
    %146 = vector.broadcast %cst_42 : f32 to vector<16x128xf32>
    %147 = arith.addf %146, %145 : vector<16x128xf32>
    %148 = arith.divf %146, %147 : vector<16x128xf32>
    %149 = math.tanh %143 : vector<16x128xf32>
    %150 = vector.extract_strided_slice %148 {offsets = [0, 0], sizes = [16, 32], strides = [1, 1]} : vector<16x128xf32> to vector<16x32xf32>
    %151 = vector.extract_strided_slice %148 {offsets = [0, 32], sizes = [16, 32], strides = [1, 1]} : vector<16x128xf32> to vector<16x32xf32>
    %152 = vector.extract_strided_slice %149 {offsets = [0, 64], sizes = [16, 32], strides = [1, 1]} : vector<16x128xf32> to vector<16x32xf32>
    %153 = vector.extract_strided_slice %148 {offsets = [0, 96], sizes = [16, 32], strides = [1, 1]} : vector<16x128xf32> to vector<16x32xf32>
    %154 = arith.mulf %151, %106 : vector<16x32xf32>
    %155 = arith.mulf %150, %152 : vector<16x32xf32>
    %156 = arith.addf %154, %155 : vector<16x32xf32>
    %157 = math.tanh %156 : vector<16x32xf32>
    %158 = arith.mulf %153, %157 : vector<16x32xf32>
    %159 = arith.addi %10, %c2_i32 : i32
    %c1_i32_43 = arith.constant 1 : i32
    %160 = arith.addi %159, %c1_i32_43 : i32
    %161 = vector.broadcast %160 : i32 to vector<16x1xi32>
    %162 = arith.cmpi eq, %3, %161 : vector<16x1xi32>
    %163 = vector.shape_cast %162 : vector<16x1xi1> to vector<16x1xi1>
    %164 = vector.broadcast %163 : vector<16x1xi1> to vector<16x32xi1>
    %165 = arith.select %164, %158, %115 : vector<16x32xi1>, vector<16x32xf32>
    %c3_i32 = arith.constant 3 : i32
    %166 = arith.truncf %158 : vector<16x32xf32> to vector<16x32xbf16>
    %cst_44 = arith.constant dense<0.000000e+00> : vector<16x128xf32>
    %167 = tpu.matmul %166, %6, %cst_44 {dimension_numbers = #tpu.dot_dimension_numbers<[1], [0], [0], [1], [0, 0, 1, 1], [], []>} : vector<16x32xbf16>, vector<32x128xbf16>, vector<16x128xf32> -> vector<16x128xf32>
    %168 = arith.index_cast %c3_i32 : i32 to index
    %c0_45 = arith.constant 0 : index
    %c0_46 = arith.constant 0 : index
    %169 = vector.load %arg2[%168, %c0_45, %c0_46] : memref<8x16x128xbf16, #tpu.memory_space<vmem>>, vector<1x16x128xbf16>
    %170 = vector.shape_cast %169 : vector<1x16x128xbf16> to vector<16x128xbf16>
    %171 = arith.extf %170 : vector<16x128xbf16> to vector<16x128xf32>
    %172 = arith.truncf %139 : vector<16x32xf32> to vector<16x32xbf16>
    %cst_47 = arith.constant dense<0.000000e+00> : vector<16x128xf32>
    %173 = tpu.matmul %172, %4, %cst_47 {dimension_numbers = #tpu.dot_dimension_numbers<[1], [0], [0], [1], [0, 0, 1, 1], [], []>} : vector<16x32xbf16>, vector<32x128xbf16>, vector<16x128xf32> -> vector<16x128xf32>
    %174 = arith.addf %171, %173 : vector<16x128xf32>
    %175 = arith.negf %174 : vector<16x128xf32>
    %176 = math.exp %175 : vector<16x128xf32>
    %cst_48 = arith.constant 1.000000e+00 : f32
    %177 = vector.broadcast %cst_48 : f32 to vector<16x128xf32>
    %178 = arith.addf %177, %176 : vector<16x128xf32>
    %179 = arith.divf %177, %178 : vector<16x128xf32>
    %180 = math.tanh %174 : vector<16x128xf32>
    %181 = vector.extract_strided_slice %179 {offsets = [0, 0], sizes = [16, 32], strides = [1, 1]} : vector<16x128xf32> to vector<16x32xf32>
    %182 = vector.extract_strided_slice %179 {offsets = [0, 32], sizes = [16, 32], strides = [1, 1]} : vector<16x128xf32> to vector<16x32xf32>
    %183 = vector.extract_strided_slice %180 {offsets = [0, 64], sizes = [16, 32], strides = [1, 1]} : vector<16x128xf32> to vector<16x32xf32>
    %184 = vector.extract_strided_slice %179 {offsets = [0, 96], sizes = [16, 32], strides = [1, 1]} : vector<16x128xf32> to vector<16x32xf32>
    %185 = arith.mulf %182, %137 : vector<16x32xf32>
    %186 = arith.mulf %181, %183 : vector<16x32xf32>
    %187 = arith.addf %185, %186 : vector<16x32xf32>
    %188 = math.tanh %187 : vector<16x32xf32>
    %189 = arith.mulf %184, %188 : vector<16x32xf32>
    %190 = arith.truncf %189 : vector<16x32xf32> to vector<16x32xbf16>
    %cst_49 = arith.constant dense<0.000000e+00> : vector<16x128xf32>
    %191 = tpu.matmul %190, %5, %cst_49 {dimension_numbers = #tpu.dot_dimension_numbers<[1], [0], [0], [1], [0, 0, 1, 1], [], []>} : vector<16x32xbf16>, vector<32x128xbf16>, vector<16x128xf32> -> vector<16x128xf32>
    %192 = arith.addf %191, %167 : vector<16x128xf32>
    %193 = arith.addf %192, %9 : vector<16x128xf32>
    %194 = arith.negf %193 : vector<16x128xf32>
    %195 = math.exp %194 : vector<16x128xf32>
    %cst_50 = arith.constant 1.000000e+00 : f32
    %196 = vector.broadcast %cst_50 : f32 to vector<16x128xf32>
    %197 = arith.addf %196, %195 : vector<16x128xf32>
    %198 = arith.divf %196, %197 : vector<16x128xf32>
    %199 = math.tanh %193 : vector<16x128xf32>
    %200 = vector.extract_strided_slice %198 {offsets = [0, 0], sizes = [16, 32], strides = [1, 1]} : vector<16x128xf32> to vector<16x32xf32>
    %201 = vector.extract_strided_slice %198 {offsets = [0, 32], sizes = [16, 32], strides = [1, 1]} : vector<16x128xf32> to vector<16x32xf32>
    %202 = vector.extract_strided_slice %199 {offsets = [0, 64], sizes = [16, 32], strides = [1, 1]} : vector<16x128xf32> to vector<16x32xf32>
    %203 = vector.extract_strided_slice %198 {offsets = [0, 96], sizes = [16, 32], strides = [1, 1]} : vector<16x128xf32> to vector<16x32xf32>
    %204 = arith.mulf %201, %156 : vector<16x32xf32>
    %205 = arith.mulf %200, %202 : vector<16x32xf32>
    %206 = arith.addf %204, %205 : vector<16x32xf32>
    %207 = math.tanh %206 : vector<16x32xf32>
    %208 = arith.mulf %203, %207 : vector<16x32xf32>
    %209 = arith.addi %10, %c3_i32 : i32
    %c1_i32_51 = arith.constant 1 : i32
    %210 = arith.addi %209, %c1_i32_51 : i32
    %211 = vector.broadcast %210 : i32 to vector<16x1xi32>
    %212 = arith.cmpi eq, %3, %211 : vector<16x1xi32>
    %213 = vector.shape_cast %212 : vector<16x1xi1> to vector<16x1xi1>
    %214 = vector.broadcast %213 : vector<16x1xi1> to vector<16x32xi1>
    %215 = arith.select %214, %208, %165 : vector<16x32xi1>, vector<16x32xf32>
    %c4_i32 = arith.constant 4 : i32
    %216 = arith.truncf %208 : vector<16x32xf32> to vector<16x32xbf16>
    %cst_52 = arith.constant dense<0.000000e+00> : vector<16x128xf32>
    %217 = tpu.matmul %216, %6, %cst_52 {dimension_numbers = #tpu.dot_dimension_numbers<[1], [0], [0], [1], [0, 0, 1, 1], [], []>} : vector<16x32xbf16>, vector<32x128xbf16>, vector<16x128xf32> -> vector<16x128xf32>
    %218 = arith.index_cast %c4_i32 : i32 to index
    %c0_53 = arith.constant 0 : index
    %c0_54 = arith.constant 0 : index
    %219 = vector.load %arg2[%218, %c0_53, %c0_54] : memref<8x16x128xbf16, #tpu.memory_space<vmem>>, vector<1x16x128xbf16>
    %220 = vector.shape_cast %219 : vector<1x16x128xbf16> to vector<16x128xbf16>
    %221 = arith.extf %220 : vector<16x128xbf16> to vector<16x128xf32>
    %222 = arith.truncf %189 : vector<16x32xf32> to vector<16x32xbf16>
    %cst_55 = arith.constant dense<0.000000e+00> : vector<16x128xf32>
    %223 = tpu.matmul %222, %4, %cst_55 {dimension_numbers = #tpu.dot_dimension_numbers<[1], [0], [0], [1], [0, 0, 1, 1], [], []>} : vector<16x32xbf16>, vector<32x128xbf16>, vector<16x128xf32> -> vector<16x128xf32>
    %224 = arith.addf %221, %223 : vector<16x128xf32>
    %225 = arith.negf %224 : vector<16x128xf32>
    %226 = math.exp %225 : vector<16x128xf32>
    %cst_56 = arith.constant 1.000000e+00 : f32
    %227 = vector.broadcast %cst_56 : f32 to vector<16x128xf32>
    %228 = arith.addf %227, %226 : vector<16x128xf32>
    %229 = arith.divf %227, %228 : vector<16x128xf32>
    %230 = math.tanh %224 : vector<16x128xf32>
    %231 = vector.extract_strided_slice %229 {offsets = [0, 0], sizes = [16, 32], strides = [1, 1]} : vector<16x128xf32> to vector<16x32xf32>
    %232 = vector.extract_strided_slice %229 {offsets = [0, 32], sizes = [16, 32], strides = [1, 1]} : vector<16x128xf32> to vector<16x32xf32>
    %233 = vector.extract_strided_slice %230 {offsets = [0, 64], sizes = [16, 32], strides = [1, 1]} : vector<16x128xf32> to vector<16x32xf32>
    %234 = vector.extract_strided_slice %229 {offsets = [0, 96], sizes = [16, 32], strides = [1, 1]} : vector<16x128xf32> to vector<16x32xf32>
    %235 = arith.mulf %232, %187 : vector<16x32xf32>
    %236 = arith.mulf %231, %233 : vector<16x32xf32>
    %237 = arith.addf %235, %236 : vector<16x32xf32>
    %238 = math.tanh %237 : vector<16x32xf32>
    %239 = arith.mulf %234, %238 : vector<16x32xf32>
    %240 = arith.truncf %239 : vector<16x32xf32> to vector<16x32xbf16>
    %cst_57 = arith.constant dense<0.000000e+00> : vector<16x128xf32>
    %241 = tpu.matmul %240, %5, %cst_57 {dimension_numbers = #tpu.dot_dimension_numbers<[1], [0], [0], [1], [0, 0, 1, 1], [], []>} : vector<16x32xbf16>, vector<32x128xbf16>, vector<16x128xf32> -> vector<16x128xf32>
    %242 = arith.addf %241, %217 : vector<16x128xf32>
    %243 = arith.addf %242, %9 : vector<16x128xf32>
    %244 = arith.negf %243 : vector<16x128xf32>
    %245 = math.exp %244 : vector<16x128xf32>
    %cst_58 = arith.constant 1.000000e+00 : f32
    %246 = vector.broadcast %cst_58 : f32 to vector<16x128xf32>
    %247 = arith.addf %246, %245 : vector<16x128xf32>
    %248 = arith.divf %246, %247 : vector<16x128xf32>
    %249 = math.tanh %243 : vector<16x128xf32>
    %250 = vector.extract_strided_slice %248 {offsets = [0, 0], sizes = [16, 32], strides = [1, 1]} : vector<16x128xf32> to vector<16x32xf32>
    %251 = vector.extract_strided_slice %248 {offsets = [0, 32], sizes = [16, 32], strides = [1, 1]} : vector<16x128xf32> to vector<16x32xf32>
    %252 = vector.extract_strided_slice %249 {offsets = [0, 64], sizes = [16, 32], strides = [1, 1]} : vector<16x128xf32> to vector<16x32xf32>
    %253 = vector.extract_strided_slice %248 {offsets = [0, 96], sizes = [16, 32], strides = [1, 1]} : vector<16x128xf32> to vector<16x32xf32>
    %254 = arith.mulf %251, %206 : vector<16x32xf32>
    %255 = arith.mulf %250, %252 : vector<16x32xf32>
    %256 = arith.addf %254, %255 : vector<16x32xf32>
    %257 = math.tanh %256 : vector<16x32xf32>
    %258 = arith.mulf %253, %257 : vector<16x32xf32>
    %259 = arith.addi %10, %c4_i32 : i32
    %c1_i32_59 = arith.constant 1 : i32
    %260 = arith.addi %259, %c1_i32_59 : i32
    %261 = vector.broadcast %260 : i32 to vector<16x1xi32>
    %262 = arith.cmpi eq, %3, %261 : vector<16x1xi32>
    %263 = vector.shape_cast %262 : vector<16x1xi1> to vector<16x1xi1>
    %264 = vector.broadcast %263 : vector<16x1xi1> to vector<16x32xi1>
    %265 = arith.select %264, %258, %215 : vector<16x32xi1>, vector<16x32xf32>
    %c5_i32 = arith.constant 5 : i32
    %266 = arith.truncf %258 : vector<16x32xf32> to vector<16x32xbf16>
    %cst_60 = arith.constant dense<0.000000e+00> : vector<16x128xf32>
    %267 = tpu.matmul %266, %6, %cst_60 {dimension_numbers = #tpu.dot_dimension_numbers<[1], [0], [0], [1], [0, 0, 1, 1], [], []>} : vector<16x32xbf16>, vector<32x128xbf16>, vector<16x128xf32> -> vector<16x128xf32>
    %268 = arith.index_cast %c5_i32 : i32 to index
    %c0_61 = arith.constant 0 : index
    %c0_62 = arith.constant 0 : index
    %269 = vector.load %arg2[%268, %c0_61, %c0_62] : memref<8x16x128xbf16, #tpu.memory_space<vmem>>, vector<1x16x128xbf16>
    %270 = vector.shape_cast %269 : vector<1x16x128xbf16> to vector<16x128xbf16>
    %271 = arith.extf %270 : vector<16x128xbf16> to vector<16x128xf32>
    %272 = arith.truncf %239 : vector<16x32xf32> to vector<16x32xbf16>
    %cst_63 = arith.constant dense<0.000000e+00> : vector<16x128xf32>
    %273 = tpu.matmul %272, %4, %cst_63 {dimension_numbers = #tpu.dot_dimension_numbers<[1], [0], [0], [1], [0, 0, 1, 1], [], []>} : vector<16x32xbf16>, vector<32x128xbf16>, vector<16x128xf32> -> vector<16x128xf32>
    %274 = arith.addf %271, %273 : vector<16x128xf32>
    %275 = arith.negf %274 : vector<16x128xf32>
    %276 = math.exp %275 : vector<16x128xf32>
    %cst_64 = arith.constant 1.000000e+00 : f32
    %277 = vector.broadcast %cst_64 : f32 to vector<16x128xf32>
    %278 = arith.addf %277, %276 : vector<16x128xf32>
    %279 = arith.divf %277, %278 : vector<16x128xf32>
    %280 = math.tanh %274 : vector<16x128xf32>
    %281 = vector.extract_strided_slice %279 {offsets = [0, 0], sizes = [16, 32], strides = [1, 1]} : vector<16x128xf32> to vector<16x32xf32>
    %282 = vector.extract_strided_slice %279 {offsets = [0, 32], sizes = [16, 32], strides = [1, 1]} : vector<16x128xf32> to vector<16x32xf32>
    %283 = vector.extract_strided_slice %280 {offsets = [0, 64], sizes = [16, 32], strides = [1, 1]} : vector<16x128xf32> to vector<16x32xf32>
    %284 = vector.extract_strided_slice %279 {offsets = [0, 96], sizes = [16, 32], strides = [1, 1]} : vector<16x128xf32> to vector<16x32xf32>
    %285 = arith.mulf %282, %237 : vector<16x32xf32>
    %286 = arith.mulf %281, %283 : vector<16x32xf32>
    %287 = arith.addf %285, %286 : vector<16x32xf32>
    %288 = math.tanh %287 : vector<16x32xf32>
    %289 = arith.mulf %284, %288 : vector<16x32xf32>
    %290 = arith.truncf %289 : vector<16x32xf32> to vector<16x32xbf16>
    %cst_65 = arith.constant dense<0.000000e+00> : vector<16x128xf32>
    %291 = tpu.matmul %290, %5, %cst_65 {dimension_numbers = #tpu.dot_dimension_numbers<[1], [0], [0], [1], [0, 0, 1, 1], [], []>} : vector<16x32xbf16>, vector<32x128xbf16>, vector<16x128xf32> -> vector<16x128xf32>
    %292 = arith.addf %291, %267 : vector<16x128xf32>
    %293 = arith.addf %292, %9 : vector<16x128xf32>
    %294 = arith.negf %293 : vector<16x128xf32>
    %295 = math.exp %294 : vector<16x128xf32>
    %cst_66 = arith.constant 1.000000e+00 : f32
    %296 = vector.broadcast %cst_66 : f32 to vector<16x128xf32>
    %297 = arith.addf %296, %295 : vector<16x128xf32>
    %298 = arith.divf %296, %297 : vector<16x128xf32>
    %299 = math.tanh %293 : vector<16x128xf32>
    %300 = vector.extract_strided_slice %298 {offsets = [0, 0], sizes = [16, 32], strides = [1, 1]} : vector<16x128xf32> to vector<16x32xf32>
    %301 = vector.extract_strided_slice %298 {offsets = [0, 32], sizes = [16, 32], strides = [1, 1]} : vector<16x128xf32> to vector<16x32xf32>
    %302 = vector.extract_strided_slice %299 {offsets = [0, 64], sizes = [16, 32], strides = [1, 1]} : vector<16x128xf32> to vector<16x32xf32>
    %303 = vector.extract_strided_slice %298 {offsets = [0, 96], sizes = [16, 32], strides = [1, 1]} : vector<16x128xf32> to vector<16x32xf32>
    %304 = arith.mulf %301, %256 : vector<16x32xf32>
    %305 = arith.mulf %300, %302 : vector<16x32xf32>
    %306 = arith.addf %304, %305 : vector<16x32xf32>
    %307 = math.tanh %306 : vector<16x32xf32>
    %308 = arith.mulf %303, %307 : vector<16x32xf32>
    %309 = arith.addi %10, %c5_i32 : i32
    %c1_i32_67 = arith.constant 1 : i32
    %310 = arith.addi %309, %c1_i32_67 : i32
    %311 = vector.broadcast %310 : i32 to vector<16x1xi32>
    %312 = arith.cmpi eq, %3, %311 : vector<16x1xi32>
    %313 = vector.shape_cast %312 : vector<16x1xi1> to vector<16x1xi1>
    %314 = vector.broadcast %313 : vector<16x1xi1> to vector<16x32xi1>
    %315 = arith.select %314, %308, %265 : vector<16x32xi1>, vector<16x32xf32>
    %c6_i32 = arith.constant 6 : i32
    %316 = arith.truncf %308 : vector<16x32xf32> to vector<16x32xbf16>
    %cst_68 = arith.constant dense<0.000000e+00> : vector<16x128xf32>
    %317 = tpu.matmul %316, %6, %cst_68 {dimension_numbers = #tpu.dot_dimension_numbers<[1], [0], [0], [1], [0, 0, 1, 1], [], []>} : vector<16x32xbf16>, vector<32x128xbf16>, vector<16x128xf32> -> vector<16x128xf32>
    %318 = arith.index_cast %c6_i32 : i32 to index
    %c0_69 = arith.constant 0 : index
    %c0_70 = arith.constant 0 : index
    %319 = vector.load %arg2[%318, %c0_69, %c0_70] : memref<8x16x128xbf16, #tpu.memory_space<vmem>>, vector<1x16x128xbf16>
    %320 = vector.shape_cast %319 : vector<1x16x128xbf16> to vector<16x128xbf16>
    %321 = arith.extf %320 : vector<16x128xbf16> to vector<16x128xf32>
    %322 = arith.truncf %289 : vector<16x32xf32> to vector<16x32xbf16>
    %cst_71 = arith.constant dense<0.000000e+00> : vector<16x128xf32>
    %323 = tpu.matmul %322, %4, %cst_71 {dimension_numbers = #tpu.dot_dimension_numbers<[1], [0], [0], [1], [0, 0, 1, 1], [], []>} : vector<16x32xbf16>, vector<32x128xbf16>, vector<16x128xf32> -> vector<16x128xf32>
    %324 = arith.addf %321, %323 : vector<16x128xf32>
    %325 = arith.negf %324 : vector<16x128xf32>
    %326 = math.exp %325 : vector<16x128xf32>
    %cst_72 = arith.constant 1.000000e+00 : f32
    %327 = vector.broadcast %cst_72 : f32 to vector<16x128xf32>
    %328 = arith.addf %327, %326 : vector<16x128xf32>
    %329 = arith.divf %327, %328 : vector<16x128xf32>
    %330 = math.tanh %324 : vector<16x128xf32>
    %331 = vector.extract_strided_slice %329 {offsets = [0, 0], sizes = [16, 32], strides = [1, 1]} : vector<16x128xf32> to vector<16x32xf32>
    %332 = vector.extract_strided_slice %329 {offsets = [0, 32], sizes = [16, 32], strides = [1, 1]} : vector<16x128xf32> to vector<16x32xf32>
    %333 = vector.extract_strided_slice %330 {offsets = [0, 64], sizes = [16, 32], strides = [1, 1]} : vector<16x128xf32> to vector<16x32xf32>
    %334 = vector.extract_strided_slice %329 {offsets = [0, 96], sizes = [16, 32], strides = [1, 1]} : vector<16x128xf32> to vector<16x32xf32>
    %335 = arith.mulf %332, %287 : vector<16x32xf32>
    %336 = arith.mulf %331, %333 : vector<16x32xf32>
    %337 = arith.addf %335, %336 : vector<16x32xf32>
    %338 = math.tanh %337 : vector<16x32xf32>
    %339 = arith.mulf %334, %338 : vector<16x32xf32>
    %340 = arith.truncf %339 : vector<16x32xf32> to vector<16x32xbf16>
    %cst_73 = arith.constant dense<0.000000e+00> : vector<16x128xf32>
    %341 = tpu.matmul %340, %5, %cst_73 {dimension_numbers = #tpu.dot_dimension_numbers<[1], [0], [0], [1], [0, 0, 1, 1], [], []>} : vector<16x32xbf16>, vector<32x128xbf16>, vector<16x128xf32> -> vector<16x128xf32>
    %342 = arith.addf %341, %317 : vector<16x128xf32>
    %343 = arith.addf %342, %9 : vector<16x128xf32>
    %344 = arith.negf %343 : vector<16x128xf32>
    %345 = math.exp %344 : vector<16x128xf32>
    %cst_74 = arith.constant 1.000000e+00 : f32
    %346 = vector.broadcast %cst_74 : f32 to vector<16x128xf32>
    %347 = arith.addf %346, %345 : vector<16x128xf32>
    %348 = arith.divf %346, %347 : vector<16x128xf32>
    %349 = math.tanh %343 : vector<16x128xf32>
    %350 = vector.extract_strided_slice %348 {offsets = [0, 0], sizes = [16, 32], strides = [1, 1]} : vector<16x128xf32> to vector<16x32xf32>
    %351 = vector.extract_strided_slice %348 {offsets = [0, 32], sizes = [16, 32], strides = [1, 1]} : vector<16x128xf32> to vector<16x32xf32>
    %352 = vector.extract_strided_slice %349 {offsets = [0, 64], sizes = [16, 32], strides = [1, 1]} : vector<16x128xf32> to vector<16x32xf32>
    %353 = vector.extract_strided_slice %348 {offsets = [0, 96], sizes = [16, 32], strides = [1, 1]} : vector<16x128xf32> to vector<16x32xf32>
    %354 = arith.mulf %351, %306 : vector<16x32xf32>
    %355 = arith.mulf %350, %352 : vector<16x32xf32>
    %356 = arith.addf %354, %355 : vector<16x32xf32>
    %357 = math.tanh %356 : vector<16x32xf32>
    %358 = arith.mulf %353, %357 : vector<16x32xf32>
    %359 = arith.addi %10, %c6_i32 : i32
    %c1_i32_75 = arith.constant 1 : i32
    %360 = arith.addi %359, %c1_i32_75 : i32
    %361 = vector.broadcast %360 : i32 to vector<16x1xi32>
    %362 = arith.cmpi eq, %3, %361 : vector<16x1xi32>
    %363 = vector.shape_cast %362 : vector<16x1xi1> to vector<16x1xi1>
    %364 = vector.broadcast %363 : vector<16x1xi1> to vector<16x32xi1>
    %365 = arith.select %364, %358, %315 : vector<16x32xi1>, vector<16x32xf32>
    %c7_i32 = arith.constant 7 : i32
    %366 = arith.truncf %358 : vector<16x32xf32> to vector<16x32xbf16>
    %cst_76 = arith.constant dense<0.000000e+00> : vector<16x128xf32>
    %367 = tpu.matmul %366, %6, %cst_76 {dimension_numbers = #tpu.dot_dimension_numbers<[1], [0], [0], [1], [0, 0, 1, 1], [], []>} : vector<16x32xbf16>, vector<32x128xbf16>, vector<16x128xf32> -> vector<16x128xf32>
    %368 = arith.index_cast %c7_i32 : i32 to index
    %c0_77 = arith.constant 0 : index
    %c0_78 = arith.constant 0 : index
    %369 = vector.load %arg2[%368, %c0_77, %c0_78] : memref<8x16x128xbf16, #tpu.memory_space<vmem>>, vector<1x16x128xbf16>
    %370 = vector.shape_cast %369 : vector<1x16x128xbf16> to vector<16x128xbf16>
    %371 = arith.extf %370 : vector<16x128xbf16> to vector<16x128xf32>
    %372 = arith.truncf %339 : vector<16x32xf32> to vector<16x32xbf16>
    %cst_79 = arith.constant dense<0.000000e+00> : vector<16x128xf32>
    %373 = tpu.matmul %372, %4, %cst_79 {dimension_numbers = #tpu.dot_dimension_numbers<[1], [0], [0], [1], [0, 0, 1, 1], [], []>} : vector<16x32xbf16>, vector<32x128xbf16>, vector<16x128xf32> -> vector<16x128xf32>
    %374 = arith.addf %371, %373 : vector<16x128xf32>
    %375 = arith.negf %374 : vector<16x128xf32>
    %376 = math.exp %375 : vector<16x128xf32>
    %cst_80 = arith.constant 1.000000e+00 : f32
    %377 = vector.broadcast %cst_80 : f32 to vector<16x128xf32>
    %378 = arith.addf %377, %376 : vector<16x128xf32>
    %379 = arith.divf %377, %378 : vector<16x128xf32>
    %380 = math.tanh %374 : vector<16x128xf32>
    %381 = vector.extract_strided_slice %379 {offsets = [0, 0], sizes = [16, 32], strides = [1, 1]} : vector<16x128xf32> to vector<16x32xf32>
    %382 = vector.extract_strided_slice %379 {offsets = [0, 32], sizes = [16, 32], strides = [1, 1]} : vector<16x128xf32> to vector<16x32xf32>
    %383 = vector.extract_strided_slice %380 {offsets = [0, 64], sizes = [16, 32], strides = [1, 1]} : vector<16x128xf32> to vector<16x32xf32>
    %384 = vector.extract_strided_slice %379 {offsets = [0, 96], sizes = [16, 32], strides = [1, 1]} : vector<16x128xf32> to vector<16x32xf32>
    %385 = arith.mulf %382, %337 : vector<16x32xf32>
    %386 = arith.mulf %381, %383 : vector<16x32xf32>
    %387 = arith.addf %385, %386 : vector<16x32xf32>
    %388 = math.tanh %387 : vector<16x32xf32>
    %389 = arith.mulf %384, %388 : vector<16x32xf32>
    %390 = arith.truncf %389 : vector<16x32xf32> to vector<16x32xbf16>
    %cst_81 = arith.constant dense<0.000000e+00> : vector<16x128xf32>
    %391 = tpu.matmul %390, %5, %cst_81 {dimension_numbers = #tpu.dot_dimension_numbers<[1], [0], [0], [1], [0, 0, 1, 1], [], []>} : vector<16x32xbf16>, vector<32x128xbf16>, vector<16x128xf32> -> vector<16x128xf32>
    %392 = arith.addf %391, %367 : vector<16x128xf32>
    %393 = arith.addf %392, %9 : vector<16x128xf32>
    %394 = arith.negf %393 : vector<16x128xf32>
    %395 = math.exp %394 : vector<16x128xf32>
    %cst_82 = arith.constant 1.000000e+00 : f32
    %396 = vector.broadcast %cst_82 : f32 to vector<16x128xf32>
    %397 = arith.addf %396, %395 : vector<16x128xf32>
    %398 = arith.divf %396, %397 : vector<16x128xf32>
    %399 = math.tanh %393 : vector<16x128xf32>
    %400 = vector.extract_strided_slice %398 {offsets = [0, 0], sizes = [16, 32], strides = [1, 1]} : vector<16x128xf32> to vector<16x32xf32>
    %401 = vector.extract_strided_slice %398 {offsets = [0, 32], sizes = [16, 32], strides = [1, 1]} : vector<16x128xf32> to vector<16x32xf32>
    %402 = vector.extract_strided_slice %399 {offsets = [0, 64], sizes = [16, 32], strides = [1, 1]} : vector<16x128xf32> to vector<16x32xf32>
    %403 = vector.extract_strided_slice %398 {offsets = [0, 96], sizes = [16, 32], strides = [1, 1]} : vector<16x128xf32> to vector<16x32xf32>
    %404 = arith.mulf %401, %356 : vector<16x32xf32>
    %405 = arith.mulf %400, %402 : vector<16x32xf32>
    %406 = arith.addf %404, %405 : vector<16x32xf32>
    %407 = math.tanh %406 : vector<16x32xf32>
    %408 = arith.mulf %403, %407 : vector<16x32xf32>
    %409 = arith.addi %10, %c7_i32 : i32
    %c1_i32_83 = arith.constant 1 : i32
    %410 = arith.addi %409, %c1_i32_83 : i32
    %411 = vector.broadcast %410 : i32 to vector<16x1xi32>
    %412 = arith.cmpi eq, %3, %411 : vector<16x1xi32>
    %413 = vector.shape_cast %412 : vector<16x1xi1> to vector<16x1xi1>
    %414 = vector.broadcast %413 : vector<16x1xi1> to vector<16x32xi1>
    %415 = arith.select %414, %408, %365 : vector<16x32xi1>, vector<16x32xf32>
    %c8_i32_84 = arith.constant 8 : i32
    %c0_85 = arith.constant 0 : index
    %c0_86 = arith.constant 0 : index
    %416 = vector.load %arg9[%c0_85, %c0_86] : memref<16x32xf32, #tpu.memory_space<vmem>>, vector<16x32xf32>
    tpu.vector_store %arg9[%c0_85, %c0_86], %389 {strides = array<i32>} : memref<16x32xf32, #tpu.memory_space<vmem>>, vector<16x32xf32>,
    %c0_87 = arith.constant 0 : index
    %c0_88 = arith.constant 0 : index
    %417 = vector.load %arg10[%c0_87, %c0_88] : memref<16x32xf32, #tpu.memory_space<vmem>>, vector<16x32xf32>
    tpu.vector_store %arg10[%c0_87, %c0_88], %387 {strides = array<i32>} : memref<16x32xf32, #tpu.memory_space<vmem>>, vector<16x32xf32>,
    %c0_89 = arith.constant 0 : index
    %c0_90 = arith.constant 0 : index
    %418 = vector.load %arg11[%c0_89, %c0_90] : memref<16x32xf32, #tpu.memory_space<vmem>>, vector<16x32xf32>
    tpu.vector_store %arg11[%c0_89, %c0_90], %408 {strides = array<i32>} : memref<16x32xf32, #tpu.memory_space<vmem>>, vector<16x32xf32>,
    %c0_91 = arith.constant 0 : index
    %c0_92 = arith.constant 0 : index
    %419 = vector.load %arg12[%c0_91, %c0_92] : memref<16x32xf32, #tpu.memory_space<vmem>>, vector<16x32xf32>
    tpu.vector_store %arg12[%c0_91, %c0_92], %406 {strides = array<i32>} : memref<16x32xf32, #tpu.memory_space<vmem>>, vector<16x32xf32>,
    %c0_93 = arith.constant 0 : index
    %c0_94 = arith.constant 0 : index
    %420 = vector.load %arg8[%c0_93, %c0_94] : memref<16x32xf32, #tpu.memory_space<vmem>>, vector<16x32xf32>
    tpu.vector_store %arg8[%c0_93, %c0_94], %415 {strides = array<i32>} : memref<16x32xf32, #tpu.memory_space<vmem>>, vector<16x32xf32>,
    return
  }
  func.func @transform_0(%arg0: i32, %arg1: i32) -> (i32, i32, i32) {
    %c0_i32 = arith.constant 0 : i32
    %c0_i32_0 = arith.constant 0 : i32
    return %arg1, %arg0, %c0_i32 : i32, i32, i32
  }
  func.func @transform_1(%arg0: i32, %arg1: i32) -> (i32, i32) {
    %c0_i32 = arith.constant 0 : i32
    %c0_i32_0 = arith.constant 0 : i32
    return %arg0, %c0_i32 : i32, i32
  }
  func.func @transform_2(%arg0: i32, %arg1: i32) -> (i32, i32) {
    %c0_i32 = arith.constant 0 : i32
    %c0_i32_0 = arith.constant 0 : i32
    %c0_i32_1 = arith.constant 0 : i32
    return %c0_i32, %c0_i32_0 : i32, i32
  }
  func.func @transform_3(%arg0: i32, %arg1: i32) -> (i32, i32) {
    %c0_i32 = arith.constant 0 : i32
    %c0_i32_0 = arith.constant 0 : i32
    %c0_i32_1 = arith.constant 0 : i32
    return %c0_i32, %c0_i32_0 : i32, i32
  }
  func.func @transform_4(%arg0: i32, %arg1: i32) -> (i32, i32) {
    %c0_i32 = arith.constant 0 : i32
    %c0_i32_0 = arith.constant 0 : i32
    %c0_i32_1 = arith.constant 0 : i32
    return %c0_i32, %c0_i32_0 : i32, i32
  }
  func.func @transform_5(%arg0: i32, %arg1: i32) -> (i32, i32) {
    %c0_i32 = arith.constant 0 : i32
    %c0_i32_0 = arith.constant 0 : i32
    %c0_i32_1 = arith.constant 0 : i32
    return %c0_i32, %c0_i32_0 : i32, i32
  }
  func.func @transform_6(%arg0: i32, %arg1: i32) -> (i32, i32) {
    %c0_i32 = arith.constant 0 : i32
    %c0_i32_0 = arith.constant 0 : i32
    return %arg0, %c0_i32 : i32, i32
  }
}

</mosaic_0001>

<llo_original>
// kernel: lstm_packed_forward.1
$region0: #{lstm_packed_forward.1}
  #allocation0 [shape = 'u32[]', space=smem, size = 0x4, offset = 0x4, fixed_abs, tag = 'smem constant byte address 0x4 - core index']
  #allocation1 [shape = 'u32[72,128]{1,0:T(1,128)}', space=vmem, size = 0x9000, scoped, tag = 'internal scratch']
  #allocation2 [shape = 'f32[16,32]{1,0:T(8,128)}', space=vmem, size = 0x2000, scoped, tag = 'scratch operand']
  #allocation3 [shape = 'f32[16,32]{1,0:T(8,128)}', space=vmem, size = 0x2000, scoped, tag = 'scratch operand']
  #allocation4 [shape = 'f32[16,32]{1,0:T(8,128)}', space=vmem, size = 0x2000, scoped, tag = 'scratch operand']
  #allocation5 [shape = 'f32[16,32]{1,0:T(8,128)}', space=vmem, size = 0x2000, scoped, tag = 'scratch operand']
  %s0 = inlined_call_operand.vmem [shape: bf16[8,16,128], index: 0, kind: input, shape index: {}]
  %s1 = inlined_call_operand.vmem [shape: s32[16,1], index: 1, kind: input, shape index: {}]
  %s2 = inlined_call_operand.vmem [shape: bf16[32,128], index: 2, kind: input, shape index: {}]
  %s3 = inlined_call_operand.vmem [shape: bf16[32,128], index: 3, kind: input, shape index: {}]
  %s4 = inlined_call_operand.vmem [shape: bf16[32,128], index: 4, kind: input, shape index: {}]
  %s5 = inlined_call_operand.vmem [shape: f32[1,128], index: 5, kind: input, shape index: {}]
  %s6 = inlined_call_operand.vmem [shape: f32[16,32], index: 6, kind: output, shape index: {}]
  %s7 = sld [smem:[#allocation0]]
  $region38: #{lstm_packed_forward.1} parent=0
    _
  %s9 = ssub.s32 1, %s7
  %s10 = scalar_select 0, %s9, %s7
  // Predicated region
  $region2: #{lstm_packed_forward.1} parent=0 // pred_check
    _
  $region3: #{lstm_packed_forward.1} parent=0 // pred_check_branch
    %12 = sbr.rel (0) target = $region5
  $region4: #{lstm_packed_forward.1} parent=0 // pred_region
    _
  $region5: #{lstm_packed_forward.1} parent=0 // pred_fallthru
    _
  // Predicated region
  $region6: #{lstm_packed_forward.1} parent=0 // pred_check
    _
  $region7: #{lstm_packed_forward.1} parent=0 // pred_check_branch
    %14 = sbr.rel (0) target = $region9
  $region8: #{lstm_packed_forward.1} parent=0 // pred_region
    _
  $region9: #{lstm_packed_forward.1} parent=0 // pred_fallthru
    _
  // Predicated region
  $region10: #{lstm_packed_forward.1} parent=0 // pred_check
    _
  $region11: #{lstm_packed_forward.1} parent=0 // pred_check_branch
    %16 = sbr.rel (0) target = $region13
  $region12: #{lstm_packed_forward.1} parent=0 // pred_region
    _
  $region13: #{lstm_packed_forward.1} parent=0 // pred_fallthru
    _
  // Predicated region
  $region14: #{lstm_packed_forward.1} parent=0 // pred_check
    _
  $region15: #{lstm_packed_forward.1} parent=0 // pred_check_branch
    %18 = sbr.rel (0) target = $region17
  $region16: #{lstm_packed_forward.1} parent=0 // pred_region
    _
  $region17: #{lstm_packed_forward.1} parent=0 // pred_fallthru
    _
  // Predicated region
  $region18: #{lstm_packed_forward.1} parent=0 // pred_check
    _
  $region19: #{lstm_packed_forward.1} parent=0 // pred_check_branch
    %20 = sbr.rel (0) target = $region21
  $region20: #{lstm_packed_forward.1} parent=0 // pred_region
    _
  $region21: #{lstm_packed_forward.1} parent=0 // pred_fallthru
    _
  // Predicated region
  $region22: #{lstm_packed_forward.1} parent=0 // pred_check
    _
  $region23: #{lstm_packed_forward.1} parent=0 // pred_check_branch
    %22 = sbr.rel (0) target = $region25
  $region24: #{lstm_packed_forward.1} parent=0 // pred_region
    _
  $region25: #{lstm_packed_forward.1} parent=0 // pred_fallthru
    _
  %p24 = scmp.eq.s32.totalorder 0, 0
  // Predicated region
  $region26: #{lstm_packed_forward.1} parent=0 // pred_check
    %p25 = pneg %p24
  $region27: #{lstm_packed_forward.1} parent=0 // pred_check_branch
    %27 = sbr.rel (%p25) target = $region29
  $region28: #{lstm_packed_forward.1} parent=0 // pred_region
    %vm28 = vcmask 261120
    %29 = vst.msk [vmem:[#allocation2] sm:$0xff] %vm28, 0.0
    %30 = vst.msk [vmem:[#allocation2 + $0x8] sm:$0xff] %vm28, 0.0
    %31 = vst.msk [vmem:[#allocation3] sm:$0xff] %vm28, 0.0
    %32 = vst.msk [vmem:[#allocation3 + $0x8] sm:$0xff] %vm28, 0.0
    %33 = vst.msk [vmem:[#allocation4] sm:$0xff] %vm28, 0.0
    %34 = vst.msk [vmem:[#allocation4 + $0x8] sm:$0xff] %vm28, 0.0
    %35 = vst.msk [vmem:[#allocation5] sm:$0xff] %vm28, 0.0
    %36 = vst.msk [vmem:[#allocation5 + $0x8] sm:$0xff] %vm28, 0.0
    %37 = vst.msk [vmem:[%s6] sm:$0xff] %vm28, 0.0
    %38 = vst.msk [vmem:[%s6 + $0x8] sm:$0xff] %vm28, 0.0
  $region29: #{lstm_packed_forward.1} parent=0 // pred_fallthru
    _
  %v39 = vld [vmem:[%s1] sm:$0xff]
  %v40 = vld [vmem:[%s1 + $0x8] sm:$0xff]
  %v41 = vld [vmem:[%s2] sm:$0xf]
  %v42 = vld [vmem:[%s2 + $0x4] sm:$0xf]
  %v43 = vld [vmem:[%s2 + $0x8] sm:$0xf]
  %v44 = vld [vmem:[%s2 + $0xc] sm:$0xf]
  %v45 = vld [vmem:[%s3] sm:$0xf]
  %v46 = vld [vmem:[%s3 + $0x4] sm:$0xf]
  %v47 = vld [vmem:[%s3 + $0x8] sm:$0xf]
  %v48 = vld [vmem:[%s3 + $0xc] sm:$0xf]
  %v49 = vld [vmem:[%s4] sm:$0xf]
  %v50 = vld [vmem:[%s4 + $0x4] sm:$0xf]
  %v51 = vld [vmem:[%s4 + $0x8] sm:$0xf]
  %v52 = vld [vmem:[%s4 + $0xc] sm:$0xf]
  %v53 = vld [vmem:[%s5] sm:$0x1]
  %v55 = vperm.slane %v53, 0
  %s57 = smul.u32 0, 8
  %v58 = vld [vmem:[#allocation2] sm:$0xff]
  %v59 = vld [vmem:[#allocation2 + $0x8] sm:$0xff]
  %v60 = vld [vmem:[#allocation3] sm:$0xff]
  %v61 = vld [vmem:[#allocation3 + $0x8] sm:$0xff]
  %v62 = vld [vmem:[#allocation4] sm:$0xff]
  %v63 = vld [vmem:[#allocation4 + $0x8] sm:$0xff]
  %v64 = vld [vmem:[#allocation5] sm:$0xff]
  %v65 = vld [vmem:[#allocation5 + $0x8] sm:$0xff]
  %v66 = vld [vmem:[%s6] sm:$0xff]
  %v67 = vld [vmem:[%s6 + $0x8] sm:$0xff]
  %v68 = vpack.c.bf16 %v63, %v62
  %v73 = vunpack.c.l.b16 %v49
  %v74 = vunpack.c.l.b16 %v50
  %v75 = vunpack.c.l.b16 %v51
  %v76 = vunpack.c.l.b16 %v52
  %v77 = vpack.c.b16 %v74, %v73
  %v78 = vpack.c.b16 %v76, %v75
  %vm81 = vcmask 261120
  %v83 = vsel %vm81, %v68, 0
  %85 = vmatpush.bf16.msra.mxu0 0
  %86 = vmatpush.bf16.msra.mxu0 0
  %87 = vmatpush.bf16.msra.mxu0 0
  %88 = vmatpush.bf16.msra.mxu0 0
  %89 = vmatpush.bf16.msra.mxu0 0
  %90 = vmatpush.bf16.msra.mxu0 0
  %91 = vmatpush.bf16.msra.mxu0 %v78
  %92 = vmatpush.bf16.msra.mxu0 %v77
  %93 = vmatmul.bf16.gmra.mxu0 %v83
  %v94 = vpop.f32.mrf.mxu0
  %v95 = vadd.f32 0.0, %v94
  %v96 = vpop.f32.mrf.mxu0
  %v97 = vadd.f32 0.0, %v96
  %98 = vdwg.mxu0
  %v99 = vld [vmem:[%s0] sm:$0xf]
  %v100 = vld [vmem:[%s0 + $0x4] sm:$0xf]
  %v101 = vunpack.c.l.bf16 %v99
  %v102 = vunpack.c.l.bf16 %v100
  %v103 = vpack.c.bf16 %v59, %v58
  %v108 = vunpack.c.l.b16 %v41
  %v109 = vunpack.c.l.b16 %v42
  %v110 = vunpack.c.l.b16 %v43
  %v111 = vunpack.c.l.b16 %v44
  %v112 = vpack.c.b16 %v109, %v108
  %v113 = vpack.c.b16 %v111, %v110
  %v117 = vsel %vm81, %v103, 0
  %119 = vmatpush.bf16.msra.mxu0 0
  %120 = vmatpush.bf16.msra.mxu0 0
  %121 = vmatpush.bf16.msra.mxu0 0
  %122 = vmatpush.bf16.msra.mxu0 0
  %123 = vmatpush.bf16.msra.mxu0 0
  %124 = vmatpush.bf16.msra.mxu0 0
  %125 = vmatpush.bf16.msra.mxu0 %v113
  %126 = vmatpush.bf16.msra.mxu0 %v112
  %127 = vmatmul.bf16.gmra.mxu0 %v117
  %v128 = vpop.f32.mrf.mxu0
  %v129 = vadd.f32 0.0, %v128
  %v130 = vpop.f32.mrf.mxu0
  %v131 = vadd.f32 0.0, %v130
  %132 = vdwg.mxu0
  %v133 = vadd.f32 %v101, %v129
  %v134 = vadd.f32 %v102, %v131
  %v135 = vxor.u32 %v133, 2147483648
  %v136 = vxor.u32 %v134, 2147483648
  %v137 = vmul.f32 %v135, 1.442695
  %v138 = vpow.pop %v137
  %v139 = vmul.f32 %v136, 1.442695
  %v140 = vpow.pop %v139
  %v141 = vadd.f32 %v138, 1.0
  %v142 = vadd.f32 %v140, 1.0
  %v143 = vrcp.pop %v141
  %v144 = vmul.f32 %v141, %v143
  %v145 = vsub.f32 1.0, %v144
  %v146 = vmul.f32 %v143, %v145
  %v147 = vadd.f32 %v143, %v146
  %vm148 = vweird.f32 %v141
  %vm149 = vweird.f32 %v143
  %vm150 = vmor %vm148, %vm149
  %v151 = vsel %vm150, %v143, %v147
  %v152 = vand.u32 2147483647, %v141
  %vm153 = vcmp.eq.f32.partialorder %v152, 8.507059e+37
  %v154 = vand.u32 %v141, 2147483648
  %v155 = vor.u32 1.1754944e-38, %v154
  %v156 = vsel %vm153, %v155, %v151
  %v157 = vmul.f32 1.0, %v156
  %v158 = vrcp.pop %v142
  %v159 = vmul.f32 %v142, %v158
  %v160 = vsub.f32 1.0, %v159
  %v161 = vmul.f32 %v158, %v160
  %v162 = vadd.f32 %v158, %v161
  %vm163 = vweird.f32 %v142
  %vm164 = vweird.f32 %v158
  %vm165 = vmor %vm163, %vm164
  %v166 = vsel %vm165, %v158, %v162
  %v167 = vand.u32 2147483647, %v142
  %vm168 = vcmp.eq.f32.partialorder %v167, 8.507059e+37
  %v169 = vand.u32 %v142, 2147483648
  %v170 = vor.u32 1.1754944e-38, %v169
  %v171 = vsel %vm168, %v170, %v166
  %v172 = vmul.f32 1.0, %v171
  %v173 = vtanh.pop %v133
  %v174 = vtanh.pop %v134
  %177 = vrot.lane.b32.xlu0 %v60, 32
  %v178 = vpop.permute.xlu0 %177
  %179 = vrot.lane.b32.xlu0 %v61, 32
  %v180 = vpop.permute.xlu0 %179
  %v183 = vmul.f32 %v157, %v178
  %v184 = vmul.f32 %v172, %v180
  %187 = vrot.lane.b32.xlu0 %v173, 64
  %v188 = vpop.permute.xlu0 %187
  %189 = vrot.lane.b32.xlu0 %v174, 64
  %v190 = vpop.permute.xlu0 %189
  %v193 = vmul.f32 %v157, %v188
  %v194 = vmul.f32 %v172, %v190
  %197 = vrot.lane.b32.xlu0 %v193, 32
  %v198 = vpop.permute.xlu0 %197
  %199 = vrot.lane.b32.xlu0 %v194, 32
  %v200 = vpop.permute.xlu0 %199
  %v203 = vadd.f32 %v183, %v198
  %v204 = vadd.f32 %v184, %v200
  %v205 = vtanh.pop %v203
  %v206 = vtanh.pop %v204
  %209 = vrot.lane.b32.xlu0 %v205, 64
  %v210 = vpop.permute.xlu0 %209
  %211 = vrot.lane.b32.xlu0 %v206, 64
  %v212 = vpop.permute.xlu0 %211
  %v215 = vmul.f32 %v157, %v210
  %v216 = vmul.f32 %v172, %v212
  %v217 = vpack.c.bf16 %v216, %v215
  %219 = vrot.lane.b32.xlu0 %v217, 32
  %v220 = vpop.permute.xlu0 %219
  %v225 = vunpack.c.l.b16 %v45
  %v226 = vunpack.c.l.b16 %v46
  %v227 = vunpack.c.l.b16 %v47
  %v228 = vunpack.c.l.b16 %v48
  %v229 = vpack.c.b16 %v226, %v225
  %v230 = vpack.c.b16 %v228, %v227
  %v234 = vsel %vm81, %v220, 0
  %236 = vmatpush.bf16.msra.mxu0 0
  %237 = vmatpush.bf16.msra.mxu0 0
  %238 = vmatpush.bf16.msra.mxu0 0
  %239 = vmatpush.bf16.msra.mxu0 0
  %240 = vmatpush.bf16.msra.mxu0 0
  %241 = vmatpush.bf16.msra.mxu0 0
  %242 = vmatpush.bf16.msra.mxu0 %v230
  %243 = vmatpush.bf16.msra.mxu0 %v229
  %244 = vmatmul.bf16.gmra.mxu0 %v234
  %v245 = vpop.f32.mrf.mxu0
  %v246 = vadd.f32 %v95, %v245
  %v247 = vpop.f32.mrf.mxu0
  %v248 = vadd.f32 %v97, %v247
  %249 = vdwg.mxu0
  %v250 = vadd.f32 %v246, %v55
  %v251 = vadd.f32 %v248, %v55
  %v252 = vxor.u32 %v250, 2147483648
  %v253 = vxor.u32 %v251, 2147483648
  %v254 = vmul.f32 %v252, 1.442695
  %v255 = vpow.pop %v254
  %v256 = vmul.f32 %v253, 1.442695
  %v257 = vpow.pop %v256
  %v258 = vadd.f32 %v255, 1.0
  %v259 = vadd.f32 %v257, 1.0
  %v260 = vrcp.pop %v258
  %v261 = vmul.f32 %v258, %v260
  %v262 = vsub.f32 1.0, %v261
  %v263 = vmul.f32 %v260, %v262
  %v264 = vadd.f32 %v260, %v263
  %vm265 = vweird.f32 %v258
  %vm266 = vweird.f32 %v260
  %vm267 = vmor %vm265, %vm266
  %v268 = vsel %vm267, %v260, %v264
  %v269 = vand.u32 2147483647, %v258
  %vm270 = vcmp.eq.f32.partialorder %v269, 8.507059e+37
  %v271 = vand.u32 %v258, 2147483648
  %v272 = vor.u32 1.1754944e-38, %v271
  %v273 = vsel %vm270, %v272, %v268
  %v274 = vmul.f32 1.0, %v273
  %v275 = vrcp.pop %v259
  %v276 = vmul.f32 %v259, %v275
  %v277 = vsub.f32 1.0, %v276
  %v278 = vmul.f32 %v275, %v277
  %v279 = vadd.f32 %v275, %v278
  %vm280 = vweird.f32 %v259
  %vm281 = vweird.f32 %v275
  %vm282 = vmor %vm280, %vm281
  %v283 = vsel %vm282, %v275, %v279
  %v284 = vand.u32 2147483647, %v259
  %vm285 = vcmp.eq.f32.partialorder %v284, 8.507059e+37
  %v286 = vand.u32 %v259, 2147483648
  %v287 = vor.u32 1.1754944e-38, %v286
  %v288 = vsel %vm285, %v287, %v283
  %v289 = vmul.f32 1.0, %v288
  %v290 = vtanh.pop %v250
  %v291 = vtanh.pop %v251
  %294 = vrot.lane.b32.xlu0 %v64, 32
  %v295 = vpop.permute.xlu0 %294
  %296 = vrot.lane.b32.xlu0 %v65, 32
  %v297 = vpop.permute.xlu0 %296
  %v300 = vmul.f32 %v274, %v295
  %v301 = vmul.f32 %v289, %v297
  %304 = vrot.lane.b32.xlu0 %v290, 64
  %v305 = vpop.permute.xlu0 %304
  %306 = vrot.lane.b32.xlu0 %v291, 64
  %v307 = vpop.permute.xlu0 %306
  %v310 = vmul.f32 %v274, %v305
  %v311 = vmul.f32 %v289, %v307
  %314 = vrot.lane.b32.xlu0 %v310, 32
  %v315 = vpop.permute.xlu0 %314
  %316 = vrot.lane.b32.xlu0 %v311, 32
  %v317 = vpop.permute.xlu0 %316
  %v320 = vadd.f32 %v300, %v315
  %v321 = vadd.f32 %v301, %v317
  %v322 = vtanh.pop %v320
  %v323 = vtanh.pop %v321
  %326 = vrot.lane.b32.xlu0 %v322, 64
  %v327 = vpop.permute.xlu0 %326
  %328 = vrot.lane.b32.xlu0 %v323, 64
  %v329 = vpop.permute.xlu0 %328
  %v332 = vmul.f32 %v274, %v327
  %v333 = vmul.f32 %v289, %v329
  %s334 = sadd.s32 %s57, 1
  %v335 = vstv %s334
  %vm336 = vcmp.eq.s32.totalorder %v39, %v335
  %vm337 = vcmp.eq.s32.totalorder %v40, %v335
  %v338 = vsel %vm336, 1, 0
  %v339 = vsel %vm337, 1, 0
  %340 = vset.pattern.permute.xlu0 0
  %341 = vperm.xlu0 %340, %v338
  %v342 = vpop.permute.xlu0 %341
  %343 = vset.pattern.permute.xlu0 0
  %344 = vperm.xlu0 %343, %v339
  %v345 = vpop.permute.xlu0 %344
  %vm346 = vcmp.eq.s32.totalorder %v342, 1
  %vm347 = vcmp.eq.s32.totalorder %v345, 1
  %350 = vrot.lane.b32.xlu0 %v66, 96
  %v351 = vpop.permute.xlu0 %350
  %352 = vrot.lane.b32.xlu0 %v67, 96
  %v353 = vpop.permute.xlu0 %352
  %v356 = vsel %vm346, %v332, %v351
  %v357 = vsel %vm347, %v333, %v353
  %v358 = vpack.c.bf16 %v333, %v332
  %360 = vrot.lane.b32.xlu0 %v358, 32
  %v361 = vpop.permute.xlu0 %360
  %v363 = vsel %vm81, %v361, 0
  %365 = vmatpush.bf16.msra.mxu0 0
  %366 = vmatpush.bf16.msra.mxu0 0
  %367 = vmatpush.bf16.msra.mxu0 0
  %368 = vmatpush.bf16.msra.mxu0 0
  %369 = vmatpush.bf16.msra.mxu0 0
  %370 = vmatpush.bf16.msra.mxu0 0
  %371 = vmatpush.bf16.msra.mxu0 %v78
  %372 = vmatpush.bf16.msra.mxu0 %v77
  %373 = vmatmul.bf16.gmra.mxu0 %v363
  %v374 = vpop.f32.mrf.mxu0
  %v375 = vadd.f32 0.0, %v374
  %v376 = vpop.f32.mrf.mxu0
  %v377 = vadd.f32 0.0, %v376
  %378 = vdwg.mxu0
  %s379 = scalar_lea.vmem %s0, 8
  %v380 = vld [vmem:[%s379] sm:$0xf]
  %v381 = vld [vmem:[%s379 + $0x4] sm:$0xf]
  %v382 = vunpack.c.l.bf16 %v380
  %v383 = vunpack.c.l.bf16 %v381
  %384 = vmatpush.bf16.msra.mxu0 0
  %385 = vmatpush.bf16.msra.mxu0 0
  %386 = vmatpush.bf16.msra.mxu0 0
  %387 = vmatpush.bf16.msra.mxu0 0
  %388 = vmatpush.bf16.msra.mxu0 0
  %389 = vmatpush.bf16.msra.mxu0 0
  %390 = vmatpush.bf16.msra.mxu0 %v113
  %391 = vmatpush.bf16.msra.mxu0 %v112
  %392 = vmatmul.bf16.gmra.mxu0 %v234
  %v393 = vpop.f32.mrf.mxu0
  %v394 = vadd.f32 0.0, %v393
  %v395 = vpop.f32.mrf.mxu0
  %v396 = vadd.f32 0.0, %v395
  %397 = vdwg.mxu0
  %v398 = vadd.f32 %v382, %v394
  %v399 = vadd.f32 %v383, %v396
  %v400 = vxor.u32 %v398, 2147483648
  %v401 = vxor.u32 %v399, 2147483648
  %v402 = vmul.f32 %v400, 1.442695
  %v403 = vpow.pop %v402
  %v404 = vmul.f32 %v401, 1.442695
  %v405 = vpow.pop %v404
  %v406 = vadd.f32 %v403, 1.0
  %v407 = vadd.f32 %v405, 1.0
  %v408 = vrcp.pop %v406
  %v409 = vmul.f32 %v406, %v408
  %v410 = vsub.f32 1.0, %v409
  %v411 = vmul.f32 %v408, %v410
  %v412 = vadd.f32 %v408, %v411
  %vm413 = vweird.f32 %v406
  %vm414 = vweird.f32 %v408
  %vm415 = vmor %vm413, %vm414
  %v416 = vsel %vm415, %v408, %v412
  %v417 = vand.u32 2147483647, %v406
  %vm418 = vcmp.eq.f32.partialorder %v417, 8.507059e+37
  %v419 = vand.u32 %v406, 2147483648
  %v420 = vor.u32 1.1754944e-38, %v419
  %v421 = vsel %vm418, %v420, %v416
  %v422 = vmul.f32 1.0, %v421
  %v423 = vrcp.pop %v407
  %v424 = vmul.f32 %v407, %v423
  %v425 = vsub.f32 1.0, %v424
  %v426 = vmul.f32 %v423, %v425
  %v427 = vadd.f32 %v423, %v426
  %vm428 = vweird.f32 %v407
  %vm429 = vweird.f32 %v423
  %vm430 = vmor %vm428, %vm429
  %v431 = vsel %vm430, %v423, %v427
  %v432 = vand.u32 2147483647, %v407
  %vm433 = vcmp.eq.f32.partialorder %v432, 8.507059e+37
  %v434 = vand.u32 %v407, 2147483648
  %v435 = vor.u32 1.1754944e-38, %v434
  %v436 = vsel %vm433, %v435, %v431
  %v437 = vmul.f32 1.0, %v436
  %v438 = vtanh.pop %v398
  %v439 = vtanh.pop %v399
  %v440 = vmul.f32 %v422, %v203
  %v441 = vmul.f32 %v437, %v204
  %444 = vrot.lane.b32.xlu0 %v438, 64
  %v445 = vpop.permute.xlu0 %444
  %446 = vrot.lane.b32.xlu0 %v439, 64
  %v447 = vpop.permute.xlu0 %446
  %v450 = vmul.f32 %v422, %v445
  %v451 = vmul.f32 %v437, %v447
  %454 = vrot.lane.b32.xlu0 %v450, 32
  %v455 = vpop.permute.xlu0 %454
  %456 = vrot.lane.b32.xlu0 %v451, 32
  %v457 = vpop.permute.xlu0 %456
  %v460 = vadd.f32 %v440, %v455
  %v461 = vadd.f32 %v441, %v457
  %v462 = vtanh.pop %v460
  %v463 = vtanh.pop %v461
  %466 = vrot.lane.b32.xlu0 %v462, 64
  %v467 = vpop.permute.xlu0 %466
  %468 = vrot.lane.b32.xlu0 %v463, 64
  %v469 = vpop.permute.xlu0 %468
  %v472 = vmul.f32 %v422, %v467
  %v473 = vmul.f32 %v437, %v469
  %v474 = vpack.c.bf16 %v473, %v472
  %476 = vrot.lane.b32.xlu0 %v474, 32
  %v477 = vpop.permute.xlu0 %476
  %v479 = vsel %vm81, %v477, 0
  %481 = vmatpush.bf16.msra.mxu0 0
  %482 = vmatpush.bf16.msra.mxu0 0
  %483 = vmatpush.bf16.msra.mxu0 0
  %484 = vmatpush.bf16.msra.mxu0 0
  %485 = vmatpush.bf16.msra.mxu0 0
  %486 = vmatpush.bf16.msra.mxu0 0
  %487 = vmatpush.bf16.msra.mxu0 %v230
  %488 = vmatpush.bf16.msra.mxu0 %v229
  %489 = vmatmul.bf16.gmra.mxu0 %v479
  %v490 = vpop.f32.mrf.mxu0
  %v491 = vadd.f32 %v375, %v490
  %v492 = vpop.f32.mrf.mxu0
  %v493 = vadd.f32 %v377, %v492
  %494 = vdwg.mxu0
  %v495 = vadd.f32 %v491, %v55
  %v496 = vadd.f32 %v493, %v55
  %v497 = vxor.u32 %v495, 2147483648
  %v498 = vxor.u32 %v496, 2147483648
  %v499 = vmul.f32 %v497, 1.442695
  %v500 = vpow.pop %v499
  %v501 = vmul.f32 %v498, 1.442695
  %v502 = vpow.pop %v501
  %v503 = vadd.f32 %v500, 1.0
  %v504 = vadd.f32 %v502, 1.0
  %v505 = vrcp.pop %v503
  %v506 = vmul.f32 %v503, %v505
  %v507 = vsub.f32 1.0, %v506
  %v508 = vmul.f32 %v505, %v507
  %v509 = vadd.f32 %v505, %v508
  %vm510 = vweird.f32 %v503
  %vm511 = vweird.f32 %v505
  %vm512 = vmor %vm510, %vm511
  %v513 = vsel %vm512, %v505, %v509
  %v514 = vand.u32 2147483647, %v503
  %vm515 = vcmp.eq.f32.partialorder %v514, 8.507059e+37
  %v516 = vand.u32 %v503, 2147483648
  %v517 = vor.u32 1.1754944e-38, %v516
  %v518 = vsel %vm515, %v517, %v513
  %v519 = vmul.f32 1.0, %v518
  %v520 = vrcp.pop %v504
  %v521 = vmul.f32 %v504, %v520
  %v522 = vsub.f32 1.0, %v521
  %v523 = vmul.f32 %v520, %v522
  %v524 = vadd.f32 %v520, %v523
  %vm525 = vweird.f32 %v504
  %vm526 = vweird.f32 %v520
  %vm527 = vmor %vm525, %vm526
  %v528 = vsel %vm527, %v520, %v524
  %v529 = vand.u32 2147483647, %v504
  %vm530 = vcmp.eq.f32.partialorder %v529, 8.507059e+37
  %v531 = vand.u32 %v504, 2147483648
  %v532 = vor.u32 1.1754944e-38, %v531
  %v533 = vsel %vm530, %v532, %v528
  %v534 = vmul.f32 1.0, %v533
  %v535 = vtanh.pop %v495
  %v536 = vtanh.pop %v496
  %v537 = vmul.f32 %v519, %v320
  %v538 = vmul.f32 %v534, %v321
  %541 = vrot.lane.b32.xlu0 %v535, 64
  %v542 = vpop.permute.xlu0 %541
  %543 = vrot.lane.b32.xlu0 %v536, 64
  %v544 = vpop.permute.xlu0 %543
  %v547 = vmul.f32 %v519, %v542
  %v548 = vmul.f32 %v534, %v544
  %551 = vrot.lane.b32.xlu0 %v547, 32
  %v552 = vpop.permute.xlu0 %551
  %553 = vrot.lane.b32.xlu0 %v548, 32
  %v554 = vpop.permute.xlu0 %553
  %v557 = vadd.f32 %v537, %v552
  %v558 = vadd.f32 %v538, %v554
  %v559 = vtanh.pop %v557
  %v560 = vtanh.pop %v558
  %563 = vrot.lane.b32.xlu0 %v559, 64
  %v564 = vpop.permute.xlu0 %563
  %565 = vrot.lane.b32.xlu0 %v560, 64
  %v566 = vpop.permute.xlu0 %565
  %v569 = vmul.f32 %v519, %v564
  %v570 = vmul.f32 %v534, %v566
  %s571 = sadd.s32 %s57, 2
  %v572 = vstv %s571
  %vm573 = vcmp.eq.s32.totalorder %v39, %v572
  %vm574 = vcmp.eq.s32.totalorder %v40, %v572
  %v575 = vsel %vm573, 1, 0
  %v576 = vsel %vm574, 1, 0
  %577 = vset.pattern.permute.xlu0 0
  %578 = vperm.xlu0 %577, %v575
  %v579 = vpop.permute.xlu0 %578
  %580 = vset.pattern.permute.xlu0 0
  %581 = vperm.xlu0 %580, %v576
  %v582 = vpop.permute.xlu0 %581
  %vm583 = vcmp.eq.s32.totalorder %v579, 1
  %vm584 = vcmp.eq.s32.totalorder %v582, 1
  %v585 = vsel %vm583, %v569, %v356
  %v586 = vsel %vm584, %v570, %v357
  %v587 = vpack.c.bf16 %v570, %v569
  %589 = vrot.lane.b32.xlu0 %v587, 32
  %v590 = vpop.permute.xlu0 %589
  %v592 = vsel %vm81, %v590, 0
  %594 = vmatpush.bf16.msra.mxu0 0
  %595 = vmatpush.bf16.msra.mxu0 0
  %596 = vmatpush.bf16.msra.mxu0 0
  %597 = vmatpush.bf16.msra.mxu0 0
  %598 = vmatpush.bf16.msra.mxu0 0
  %599 = vmatpush.bf16.msra.mxu0 0
  %600 = vmatpush.bf16.msra.mxu0 %v78
  %601 = vmatpush.bf16.msra.mxu0 %v77
  %602 = vmatmul.bf16.gmra.mxu0 %v592
  %v603 = vpop.f32.mrf.mxu0
  %v604 = vadd.f32 0.0, %v603
  %v605 = vpop.f32.mrf.mxu0
  %v606 = vadd.f32 0.0, %v605
  %607 = vdwg.mxu0
  %s608 = scalar_lea.vmem %s0, 16
  %v609 = vld [vmem:[%s608] sm:$0xf]
  %v610 = vld [vmem:[%s608 + $0x4] sm:$0xf]
  %v611 = vunpack.c.l.bf16 %v609
  %v612 = vunpack.c.l.bf16 %v610
  %613 = vmatpush.bf16.msra.mxu0 0
  %614 = vmatpush.bf16.msra.mxu0 0
  %615 = vmatpush.bf16.msra.mxu0 0
  %616 = vmatpush.bf16.msra.mxu0 0
  %617 = vmatpush.bf16.msra.mxu0 0
  %618 = vmatpush.bf16.msra.mxu0 0
  %619 = vmatpush.bf16.msra.mxu0 %v113
  %620 = vmatpush.bf16.msra.mxu0 %v112
  %621 = vmatmul.bf16.gmra.mxu0 %v479
  %v622 = vpop.f32.mrf.mxu0
  %v623 = vadd.f32 0.0, %v622
  %v624 = vpop.f32.mrf.mxu0
  %v625 = vadd.f32 0.0, %v624
  %626 = vdwg.mxu0
  %v627 = vadd.f32 %v611, %v623
  %v628 = vadd.f32 %v612, %v625
  %v629 = vxor.u32 %v627, 2147483648
  %v630 = vxor.u32 %v628, 2147483648
  %v631 = vmul.f32 %v629, 1.442695
  %v632 = vpow.pop %v631
  %v633 = vmul.f32 %v630, 1.442695
  %v634 = vpow.pop %v633
  %v635 = vadd.f32 %v632, 1.0
  %v636 = vadd.f32 %v634, 1.0
  %v637 = vrcp.pop %v635
  %v638 = vmul.f32 %v635, %v637
  %v639 = vsub.f32 1.0, %v638
  %v640 = vmul.f32 %v637, %v639
  %v641 = vadd.f32 %v637, %v640
  %vm642 = vweird.f32 %v635
  %vm643 = vweird.f32 %v637
  %vm644 = vmor %vm642, %vm643
  %v645 = vsel %vm644, %v637, %v641
  %v646 = vand.u32 2147483647, %v635
  %vm647 = vcmp.eq.f32.partialorder %v646, 8.507059e+37
  %v648 = vand.u32 %v635, 2147483648
  %v649 = vor.u32 1.1754944e-38, %v648
  %v650 = vsel %vm647, %v649, %v645
  %v651 = vmul.f32 1.0, %v650
  %v652 = vrcp.pop %v636
  %v653 = vmul.f32 %v636, %v652
  %v654 = vsub.f32 1.0, %v653
  %v655 = vmul.f32 %v652, %v654
  %v656 = vadd.f32 %v652, %v655
  %vm657 = vweird.f32 %v636
  %vm658 = vweird.f32 %v652
  %vm659 = vmor %vm657, %vm658
  %v660 = vsel %vm659, %v652, %v656
  %v661 = vand.u32 2147483647, %v636
  %vm662 = vcmp.eq.f32.partialorder %v661, 8.507059e+37
  %v663 = vand.u32 %v636, 2147483648
  %v664 = vor.u32 1.1754944e-38, %v663
  %v665 = vsel %vm662, %v664, %v660
  %v666 = vmul.f32 1.0, %v665
  %v667 = vtanh.pop %v627
  %v668 = vtanh.pop %v628
  %v669 = vmul.f32 %v651, %v460
  %v670 = vmul.f32 %v666, %v461
  %673 = vrot.lane.b32.xlu0 %v667, 64
  %v674 = vpop.permute.xlu0 %673
  %675 = vrot.lane.b32.xlu0 %v668, 64
  %v676 = vpop.permute.xlu0 %675
  %v679 = vmul.f32 %v651, %v674
  %v680 = vmul.f32 %v666, %v676
  %683 = vrot.lane.b32.xlu0 %v679, 32
  %v684 = vpop.permute.xlu0 %683
  %685 = vrot.lane.b32.xlu0 %v680, 32
  %v686 = vpop.permute.xlu0 %685
  %v689 = vadd.f32 %v669, %v684
  %v690 = vadd.f32 %v670, %v686
  %v691 = vtanh.pop %v689
  %v692 = vtanh.pop %v690
  %695 = vrot.lane.b32.xlu0 %v691, 64
  %v696 = vpop.permute.xlu0 %695
  %697 = vrot.lane.b32.xlu0 %v692, 64
  %v698 = vpop.permute.xlu0 %697
  %v701 = vmul.f32 %v651, %v696
  %v702 = vmul.f32 %v666, %v698
  %v703 = vpack.c.bf16 %v702, %v701
  %705 = vrot.lane.b32.xlu0 %v703, 32
  %v706 = vpop.permute.xlu0 %705
  %v708 = vsel %vm81, %v706, 0
  %710 = vmatpush.bf16.msra.mxu0 0
  %711 = vmatpush.bf16.msra.mxu0 0
  %712 = vmatpush.bf16.msra.mxu0 0
  %713 = vmatpush.bf16.msra.mxu0 0
  %714 = vmatpush.bf16.msra.mxu0 0
  %715 = vmatpush.bf16.msra.mxu0 0
  %716 = vmatpush.bf16.msra.mxu0 %v230
  %717 = vmatpush.bf16.msra.mxu0 %v229
  %718 = vmatmul.bf16.gmra.mxu0 %v708
  %v719 = vpop.f32.mrf.mxu0
  %v720 = vadd.f32 %v604, %v719
  %v721 = vpop.f32.mrf.mxu0
  %v722 = vadd.f32 %v606, %v721
  %723 = vdwg.mxu0
  %v724 = vadd.f32 %v720, %v55
  %v725 = vadd.f32 %v722, %v55
  %v726 = vxor.u32 %v724, 2147483648
  %v727 = vxor.u32 %v725, 2147483648
  %v728 = vmul.f32 %v726, 1.442695
  %v729 = vpow.pop %v728
  %v730 = vmul.f32 %v727, 1.442695
  %v731 = vpow.pop %v730
  %v732 = vadd.f32 %v729, 1.0
  %v733 = vadd.f32 %v731, 1.0
  %v734 = vrcp.pop %v732
  %v735 = vmul.f32 %v732, %v734
  %v736 = vsub.f32 1.0, %v735
  %v737 = vmul.f32 %v734, %v736
  %v738 = vadd.f32 %v734, %v737
  %vm739 = vweird.f32 %v732
  %vm740 = vweird.f32 %v734
  %vm741 = vmor %vm739, %vm740
  %v742 = vsel %vm741, %v734, %v738
  %v743 = vand.u32 2147483647, %v732
  %vm744 = vcmp.eq.f32.partialorder %v743, 8.507059e+37
  %v745 = vand.u32 %v732, 2147483648
  %v746 = vor.u32 1.1754944e-38, %v745
  %v747 = vsel %vm744, %v746, %v742
  %v748 = vmul.f32 1.0, %v747
  %v749 = vrcp.pop %v733
  %v750 = vmul.f32 %v733, %v749
  %v751 = vsub.f32 1.0, %v750
  %v752 = vmul.f32 %v749, %v751
  %v753 = vadd.f32 %v749, %v752
  %vm754 = vweird.f32 %v733
  %vm755 = vweird.f32 %v749
  %vm756 = vmor %vm754, %vm755
  %v757 = vsel %vm756, %v749, %v753
  %v758 = vand.u32 2147483647, %v733
  %vm759 = vcmp.eq.f32.partialorder %v758, 8.507059e+37
  %v760 = vand.u32 %v733, 2147483648
  %v761 = vor.u32 1.1754944e-38, %v760
  %v762 = vsel %vm759, %v761, %v757
  %v763 = vmul.f32 1.0, %v762
  %v764 = vtanh.pop %v724
  %v765 = vtanh.pop %v725
  %v766 = vmul.f32 %v748, %v557
  %v767 = vmul.f32 %v763, %v558
  %770 = vrot.lane.b32.xlu0 %v764, 64
  %v771 = vpop.permute.xlu0 %770
  %772 = vrot.lane.b32.xlu0 %v765, 64
  %v773 = vpop.permute.xlu0 %772
  %v776 = vmul.f32 %v748, %v771
  %v777 = vmul.f32 %v763, %v773
  %780 = vrot.lane.b32.xlu0 %v776, 32
  %v781 = vpop.permute.xlu0 %780
  %782 = vrot.lane.b32.xlu0 %v777, 32
  %v783 = vpop.permute.xlu0 %782
  %v786 = vadd.f32 %v766, %v781
  %v787 = vadd.f32 %v767, %v783
  %v788 = vtanh.pop %v786
  %v789 = vtanh.pop %v787
  %792 = vrot.lane.b32.xlu0 %v788, 64
  %v793 = vpop.permute.xlu0 %792
  %794 = vrot.lane.b32.xlu0 %v789, 64
  %v795 = vpop.permute.xlu0 %794
  %v798 = vmul.f32 %v748, %v793
  %v799 = vmul.f32 %v763, %v795
  %s800 = sadd.s32 %s57, 3
  %v801 = vstv %s800
  %vm802 = vcmp.eq.s32.totalorder %v39, %v801
  %vm803 = vcmp.eq.s32.totalorder %v40, %v801
  %v804 = vsel %vm802, 1, 0
  %v805 = vsel %vm803, 1, 0
  %806 = vset.pattern.permute.xlu0 0
  %807 = vperm.xlu0 %806, %v804
  %v808 = vpop.permute.xlu0 %807
  %809 = vset.pattern.permute.xlu0 0
  %810 = vperm.xlu0 %809, %v805
  %v811 = vpop.permute.xlu0 %810
  %vm812 = vcmp.eq.s32.totalorder %v808, 1
  %vm813 = vcmp.eq.s32.totalorder %v811, 1
  %v814 = vsel %vm812, %v798, %v585
  %v815 = vsel %vm813, %v799, %v586
  %v816 = vpack.c.bf16 %v799, %v798
  %818 = vrot.lane.b32.xlu0 %v816, 32
  %v819 = vpop.permute.xlu0 %818
  %v821 = vsel %vm81, %v819, 0
  %823 = vmatpush.bf16.msra.mxu0 0
  %824 = vmatpush.bf16.msra.mxu0 0
  %825 = vmatpush.bf16.msra.mxu0 0
  %826 = vmatpush.bf16.msra.mxu0 0
  %827 = vmatpush.bf16.msra.mxu0 0
  %828 = vmatpush.bf16.msra.mxu0 0
  %829 = vmatpush.bf16.msra.mxu0 %v78
  %830 = vmatpush.bf16.msra.mxu0 %v77
  %831 = vmatmul.bf16.gmra.mxu0 %v821
  %v832 = vpop.f32.mrf.mxu0
  %v833 = vadd.f32 0.0, %v832
  %v834 = vpop.f32.mrf.mxu0
  %v835 = vadd.f32 0.0, %v834
  %836 = vdwg.mxu0
  %s837 = scalar_lea.vmem %s0, 24
  %v838 = vld [vmem:[%s837] sm:$0xf]
  %v839 = vld [vmem:[%s837 + $0x4] sm:$0xf]
  %v840 = vunpack.c.l.bf16 %v838
  %v841 = vunpack.c.l.bf16 %v839
  %842 = vmatpush.bf16.msra.mxu0 0
  %843 = vmatpush.bf16.msra.mxu0 0
  %844 = vmatpush.bf16.msra.mxu0 0
  %845 = vmatpush.bf16.msra.mxu0 0
  %846 = vmatpush.bf16.msra.mxu0 0
  %847 = vmatpush.bf16.msra.mxu0 0
  %848 = vmatpush.bf16.msra.mxu0 %v113
  %849 = vmatpush.bf16.msra.mxu0 %v112
  %850 = vmatmul.bf16.gmra.mxu0 %v708
  %v851 = vpop.f32.mrf.mxu0
  %v852 = vadd.f32 0.0, %v851
  %v853 = vpop.f32.mrf.mxu0
  %v854 = vadd.f32 0.0, %v853
  %855 = vdwg.mxu0
  %v856 = vadd.f32 %v840, %v852
  %v857 = vadd.f32 %v841, %v854
  %v858 = vxor.u32 %v856, 2147483648
  %v859 = vxor.u32 %v857, 2147483648
  %v860 = vmul.f32 %v858, 1.442695
  %v861 = vpow.pop %v860
  %v862 = vmul.f32 %v859, 1.442695
  %v863 = vpow.pop %v862
  %v864 = vadd.f32 %v861, 1.0
  %v865 = vadd.f32 %v863, 1.0
  %v866 = vrcp.pop %v864
  %v867 = vmul.f32 %v864, %v866
  %v868 = vsub.f32 1.0, %v867
  %v869 = vmul.f32 %v866, %v868
  %v870 = vadd.f32 %v866, %v869
  %vm871 = vweird.f32 %v864
  %vm872 = vweird.f32 %v866
  %vm873 = vmor %vm871, %vm872
  %v874 = vsel %vm873, %v866, %v870
  %v875 = vand.u32 2147483647, %v864
  %vm876 = vcmp.eq.f32.partialorder %v875, 8.507059e+37
  %v877 = vand.u32 %v864, 2147483648
  %v878 = vor.u32 1.1754944e-38, %v877
  %v879 = vsel %vm876, %v878, %v874
  %v880 = vmul.f32 1.0, %v879
  %v881 = vrcp.pop %v865
  %v882 = vmul.f32 %v865, %v881
  %v883 = vsub.f32 1.0, %v882
  %v884 = vmul.f32 %v881, %v883
  %v885 = vadd.f32 %v881, %v884
  %vm886 = vweird.f32 %v865
  %vm887 = vweird.f32 %v881
  %vm888 = vmor %vm886, %vm887
  %v889 = vsel %vm888, %v881, %v885
  %v890 = vand.u32 2147483647, %v865
  %vm891 = vcmp.eq.f32.partialorder %v890, 8.507059e+37
  %v892 = vand.u32 %v865, 2147483648
  %v893 = vor.u32 1.1754944e-38, %v892
  %v894 = vsel %vm891, %v893, %v889
  %v895 = vmul.f32 1.0, %v894
  %v896 = vtanh.pop %v856
  %v897 = vtanh.pop %v857
  %v898 = vmul.f32 %v880, %v689
  %v899 = vmul.f32 %v895, %v690
  %902 = vrot.lane.b32.xlu0 %v896, 64
  %v903 = vpop.permute.xlu0 %902
  %904 = vrot.lane.b32.xlu0 %v897, 64
  %v905 = vpop.permute.xlu0 %904
  %v908 = vmul.f32 %v880, %v903
  %v909 = vmul.f32 %v895, %v905
  %912 = vrot.lane.b32.xlu0 %v908, 32
  %v913 = vpop.permute.xlu0 %912
  %914 = vrot.lane.b32.xlu0 %v909, 32
  %v915 = vpop.permute.xlu0 %914
  %v918 = vadd.f32 %v898, %v913
  %v919 = vadd.f32 %v899, %v915
  %v920 = vtanh.pop %v918
  %v921 = vtanh.pop %v919
  %924 = vrot.lane.b32.xlu0 %v920, 64
  %v925 = vpop.permute.xlu0 %924
  %926 = vrot.lane.b32.xlu0 %v921, 64
  %v927 = vpop.permute.xlu0 %926
  %v930 = vmul.f32 %v880, %v925
  %v931 = vmul.f32 %v895, %v927
  %v932 = vpack.c.bf16 %v931, %v930
  %934 = vrot.lane.b32.xlu0 %v932, 32
  %v935 = vpop.permute.xlu0 %934
  %v937 = vsel %vm81, %v935, 0
  %939 = vmatpush.bf16.msra.mxu0 0
  %940 = vmatpush.bf16.msra.mxu0 0
  %941 = vmatpush.bf16.msra.mxu0 0
  %942 = vmatpush.bf16.msra.mxu0 0
  %943 = vmatpush.bf16.msra.mxu0 0
  %944 = vmatpush.bf16.msra.mxu0 0
  %945 = vmatpush.bf16.msra.mxu0 %v230
  %946 = vmatpush.bf16.msra.mxu0 %v229
  %947 = vmatmul.bf16.gmra.mxu0 %v937
  %v948 = vpop.f32.mrf.mxu0
  %v949 = vadd.f32 %v833, %v948
  %v950 = vpop.f32.mrf.mxu0
  %v951 = vadd.f32 %v835, %v950
  %952 = vdwg.mxu0
  %v953 = vadd.f32 %v949, %v55
  %v954 = vadd.f32 %v951, %v55
  %v955 = vxor.u32 %v953, 2147483648
  %v956 = vxor.u32 %v954, 2147483648
  %v957 = vmul.f32 %v955, 1.442695
  %v958 = vpow.pop %v957
  %v959 = vmul.f32 %v956, 1.442695
  %v960 = vpow.pop %v959
  %v961 = vadd.f32 %v958, 1.0
  %v962 = vadd.f32 %v960, 1.0
  %v963 = vrcp.pop %v961
  %v964 = vmul.f32 %v961, %v963
  %v965 = vsub.f32 1.0, %v964
  %v966 = vmul.f32 %v963, %v965
  %v967 = vadd.f32 %v963, %v966
  %vm968 = vweird.f32 %v961
  %vm969 = vweird.f32 %v963
  %vm970 = vmor %vm968, %vm969
  %v971 = vsel %vm970, %v963, %v967
  %v972 = vand.u32 2147483647, %v961
  %vm973 = vcmp.eq.f32.partialorder %v972, 8.507059e+37
  %v974 = vand.u32 %v961, 2147483648
  %v975 = vor.u32 1.1754944e-38, %v974
  %v976 = vsel %vm973, %v975, %v971
  %v977 = vmul.f32 1.0, %v976
  %v978 = vrcp.pop %v962
  %v979 = vmul.f32 %v962, %v978
  %v980 = vsub.f32 1.0, %v979
  %v981 = vmul.f32 %v978, %v980
  %v982 = vadd.f32 %v978, %v981
  %vm983 = vweird.f32 %v962
  %vm984 = vweird.f32 %v978
  %vm985 = vmor %vm983, %vm984
  %v986 = vsel %vm985, %v978, %v982
  %v987 = vand.u32 2147483647, %v962
  %vm988 = vcmp.eq.f32.partialorder %v987, 8.507059e+37
  %v989 = vand.u32 %v962, 2147483648
  %v990 = vor.u32 1.1754944e-38, %v989
  %v991 = vsel %vm988, %v990, %v986
  %v992 = vmul.f32 1.0, %v991
  %v993 = vtanh.pop %v953
  %v994 = vtanh.pop %v954
  %v995 = vmul.f32 %v977, %v786
  %v996 = vmul.f32 %v992, %v787
  %999 = vrot.lane.b32.xlu0 %v993, 64
  %v1000 = vpop.permute.xlu0 %999
  %1001 = vrot.lane.b32.xlu0 %v994, 64
  %v1002 = vpop.permute.xlu0 %1001
  %v1005 = vmul.f32 %v977, %v1000
  %v1006 = vmul.f32 %v992, %v1002
  %1009 = vrot.lane.b32.xlu0 %v1005, 32
  %v1010 = vpop.permute.xlu0 %1009
  %1011 = vrot.lane.b32.xlu0 %v1006, 32
  %v1012 = vpop.permute.xlu0 %1011
  %v1015 = vadd.f32 %v995, %v1010
  %v1016 = vadd.f32 %v996, %v1012
  %v1017 = vtanh.pop %v1015
  %v1018 = vtanh.pop %v1016
  %1021 = vrot.lane.b32.xlu0 %v1017, 64
  %v1022 = vpop.permute.xlu0 %1021
  %1023 = vrot.lane.b32.xlu0 %v1018, 64
  %v1024 = vpop.permute.xlu0 %1023
  %v1027 = vmul.f32 %v977, %v1022
  %v1028 = vmul.f32 %v992, %v1024
  %s1029 = sadd.s32 %s57, 4
  %v1030 = vstv %s1029
  %vm1031 = vcmp.eq.s32.totalorder %v39, %v1030
  %vm1032 = vcmp.eq.s32.totalorder %v40, %v1030
  %v1033 = vsel %vm1031, 1, 0
  %v1034 = vsel %vm1032, 1, 0
  %1035 = vset.pattern.permute.xlu0 0
  %1036 = vperm.xlu0 %1035, %v1033
  %v1037 = vpop.permute.xlu0 %1036
  %1038 = vset.pattern.permute.xlu0 0
  %1039 = vperm.xlu0 %1038, %v1034
  %v1040 = vpop.permute.xlu0 %1039
  %vm1041 = vcmp.eq.s32.totalorder %v1037, 1
  %vm1042 = vcmp.eq.s32.totalorder %v1040, 1
  %v1043 = vsel %vm1041, %v1027, %v814
  %v1044 = vsel %vm1042, %v1028, %v815
  %v1045 = vpack.c.bf16 %v1028, %v1027
  %1047 = vrot.lane.b32.xlu0 %v1045, 32
  %v1048 = vpop.permute.xlu0 %1047
  %v1050 = vsel %vm81, %v1048, 0
  %1052 = vmatpush.bf16.msra.mxu0 0
  %1053 = vmatpush.bf16.msra.mxu0 0
  %1054 = vmatpush.bf16.msra.mxu0 0
  %1055 = vmatpush.bf16.msra.mxu0 0
  %1056 = vmatpush.bf16.msra.mxu0 0
  %1057 = vmatpush.bf16.msra.mxu0 0
  %1058 = vmatpush.bf16.msra.mxu0 %v78
  %1059 = vmatpush.bf16.msra.mxu0 %v77
  %1060 = vmatmul.bf16.gmra.mxu0 %v1050
  %v1061 = vpop.f32.mrf.mxu0
  %v1062 = vadd.f32 0.0, %v1061
  %v1063 = vpop.f32.mrf.mxu0
  %v1064 = vadd.f32 0.0, %v1063
  %1065 = vdwg.mxu0
  %s1066 = scalar_lea.vmem %s0, 32
  %v1067 = vld [vmem:[%s1066] sm:$0xf]
  %v1068 = vld [vmem:[%s1066 + $0x4] sm:$0xf]
  %v1069 = vunpack.c.l.bf16 %v1067
  %v1070 = vunpack.c.l.bf16 %v1068
  %1071 = vmatpush.bf16.msra.mxu0 0
  %1072 = vmatpush.bf16.msra.mxu0 0
  %1073 = vmatpush.bf16.msra.mxu0 0
  %1074 = vmatpush.bf16.msra.mxu0 0
  %1075 = vmatpush.bf16.msra.mxu0 0
  %1076 = vmatpush.bf16.msra.mxu0 0
  %1077 = vmatpush.bf16.msra.mxu0 %v113
  %1078 = vmatpush.bf16.msra.mxu0 %v112
  %1079 = vmatmul.bf16.gmra.mxu0 %v937
  %v1080 = vpop.f32.mrf.mxu0
  %v1081 = vadd.f32 0.0, %v1080
  %v1082 = vpop.f32.mrf.mxu0
  %v1083 = vadd.f32 0.0, %v1082
  %1084 = vdwg.mxu0
  %v1085 = vadd.f32 %v1069, %v1081
  %v1086 = vadd.f32 %v1070, %v1083
  %v1087 = vxor.u32 %v1085, 2147483648
  %v1088 = vxor.u32 %v1086, 2147483648
  %v1089 = vmul.f32 %v1087, 1.442695
  %v1090 = vpow.pop %v1089
  %v1091 = vmul.f32 %v1088, 1.442695
  %v1092 = vpow.pop %v1091
  %v1093 = vadd.f32 %v1090, 1.0
  %v1094 = vadd.f32 %v1092, 1.0
  %v1095 = vrcp.pop %v1093
  %v1096 = vmul.f32 %v1093, %v1095
  %v1097 = vsub.f32 1.0, %v1096
  %v1098 = vmul.f32 %v1095, %v1097
  %v1099 = vadd.f32 %v1095, %v1098
  %vm1100 = vweird.f32 %v1093
  %vm1101 = vweird.f32 %v1095
  %vm1102 = vmor %vm1100, %vm1101
  %v1103 = vsel %vm1102, %v1095, %v1099
  %v1104 = vand.u32 2147483647, %v1093
  %vm1105 = vcmp.eq.f32.partialorder %v1104, 8.507059e+37
  %v1106 = vand.u32 %v1093, 2147483648
  %v1107 = vor.u32 1.1754944e-38, %v1106
  %v1108 = vsel %vm1105, %v1107, %v1103
  %v1109 = vmul.f32 1.0, %v1108
  %v1110 = vrcp.pop %v1094
  %v1111 = vmul.f32 %v1094, %v1110
  %v1112 = vsub.f32 1.0, %v1111
  %v1113 = vmul.f32 %v1110, %v1112
  %v1114 = vadd.f32 %v1110, %v1113
  %vm1115 = vweird.f32 %v1094
  %vm1116 = vweird.f32 %v1110
  %vm1117 = vmor %vm1115, %vm1116
  %v1118 = vsel %vm1117, %v1110, %v1114
  %v1119 = vand.u32 2147483647, %v1094
  %vm1120 = vcmp.eq.f32.partialorder %v1119, 8.507059e+37
  %v1121 = vand.u32 %v1094, 2147483648
  %v1122 = vor.u32 1.1754944e-38, %v1121
  %v1123 = vsel %vm1120, %v1122, %v1118
  %v1124 = vmul.f32 1.0, %v1123
  %v1125 = vtanh.pop %v1085
  %v1126 = vtanh.pop %v1086
  %v1127 = vmul.f32 %v1109, %v918
  %v1128 = vmul.f32 %v1124, %v919
  %1131 = vrot.lane.b32.xlu0 %v1125, 64
  %v1132 = vpop.permute.xlu0 %1131
  %1133 = vrot.lane.b32.xlu0 %v1126, 64
  %v1134 = vpop.permute.xlu0 %1133
  %v1137 = vmul.f32 %v1109, %v1132
  %v1138 = vmul.f32 %v1124, %v1134
  %1141 = vrot.lane.b32.xlu0 %v1137, 32
  %v1142 = vpop.permute.xlu0 %1141
  %1143 = vrot.lane.b32.xlu0 %v1138, 32
  %v1144 = vpop.permute.xlu0 %1143
  %v1147 = vadd.f32 %v1127, %v1142
  %v1148 = vadd.f32 %v1128, %v1144
  %v1149 = vtanh.pop %v1147
  %v1150 = vtanh.pop %v1148
  %1153 = vrot.lane.b32.xlu0 %v1149, 64
  %v1154 = vpop.permute.xlu0 %1153
  %1155 = vrot.lane.b32.xlu0 %v1150, 64
  %v1156 = vpop.permute.xlu0 %1155
  %v1159 = vmul.f32 %v1109, %v1154
  %v1160 = vmul.f32 %v1124, %v1156
  %v1161 = vpack.c.bf16 %v1160, %v1159
  %1163 = vrot.lane.b32.xlu0 %v1161, 32
  %v1164 = vpop.permute.xlu0 %1163
  %v1166 = vsel %vm81, %v1164, 0
  %1168 = vmatpush.bf16.msra.mxu0 0
  %1169 = vmatpush.bf16.msra.mxu0 0
  %1170 = vmatpush.bf16.msra.mxu0 0
  %1171 = vmatpush.bf16.msra.mxu0 0
  %1172 = vmatpush.bf16.msra.mxu0 0
  %1173 = vmatpush.bf16.msra.mxu0 0
  %1174 = vmatpush.bf16.msra.mxu0 %v230
  %1175 = vmatpush.bf16.msra.mxu0 %v229
  %1176 = vmatmul.bf16.gmra.mxu0 %v1166
  %v1177 = vpop.f32.mrf.mxu0
  %v1178 = vadd.f32 %v1062, %v1177
  %v1179 = vpop.f32.mrf.mxu0
  %v1180 = vadd.f32 %v1064, %v1179
  %1181 = vdwg.mxu0
  %v1182 = vadd.f32 %v1178, %v55
  %v1183 = vadd.f32 %v1180, %v55
  %v1184 = vxor.u32 %v1182, 2147483648
  %v1185 = vxor.u32 %v1183, 2147483648
  %v1186 = vmul.f32 %v1184, 1.442695
  %v1187 = vpow.pop %v1186
  %v1188 = vmul.f32 %v1185, 1.442695
  %v1189 = vpow.pop %v1188
  %v1190 = vadd.f32 %v1187, 1.0
  %v1191 = vadd.f32 %v1189, 1.0
  %v1192 = vrcp.pop %v1190
  %v1193 = vmul.f32 %v1190, %v1192
  %v1194 = vsub.f32 1.0, %v1193
  %v1195 = vmul.f32 %v1192, %v1194
  %v1196 = vadd.f32 %v1192, %v1195
  %vm1197 = vweird.f32 %v1190
  %vm1198 = vweird.f32 %v1192
  %vm1199 = vmor %vm1197, %vm1198
  %v1200 = vsel %vm1199, %v1192, %v1196
  %v1201 = vand.u32 2147483647, %v1190
  %vm1202 = vcmp.eq.f32.partialorder %v1201, 8.507059e+37
  %v1203 = vand.u32 %v1190, 2147483648
  %v1204 = vor.u32 1.1754944e-38, %v1203
  %v1205 = vsel %vm1202, %v1204, %v1200
  %v1206 = vmul.f32 1.0, %v1205
  %v1207 = vrcp.pop %v1191
  %v1208 = vmul.f32 %v1191, %v1207
  %v1209 = vsub.f32 1.0, %v1208
  %v1210 = vmul.f32 %v1207, %v1209
  %v1211 = vadd.f32 %v1207, %v1210
  %vm1212 = vweird.f32 %v1191
  %vm1213 = vweird.f32 %v1207
  %vm1214 = vmor %vm1212, %vm1213
  %v1215 = vsel %vm1214, %v1207, %v1211
  %v1216 = vand.u32 2147483647, %v1191
  %vm1217 = vcmp.eq.f32.partialorder %v1216, 8.507059e+37
  %v1218 = vand.u32 %v1191, 2147483648
  %v1219 = vor.u32 1.1754944e-38, %v1218
  %v1220 = vsel %vm1217, %v1219, %v1215
  %v1221 = vmul.f32 1.0, %v1220
  %v1222 = vtanh.pop %v1182
  %v1223 = vtanh.pop %v1183
  %v1224 = vmul.f32 %v1206, %v1015
  %v1225 = vmul.f32 %v1221, %v1016
  %1228 = vrot.lane.b32.xlu0 %v1222, 64
  %v1229 = vpop.permute.xlu0 %1228
  %1230 = vrot.lane.b32.xlu0 %v1223, 64
  %v1231 = vpop.permute.xlu0 %1230
  %v1234 = vmul.f32 %v1206, %v1229
  %v1235 = vmul.f32 %v1221, %v1231
  %1238 = vrot.lane.b32.xlu0 %v1234, 32
  %v1239 = vpop.permute.xlu0 %1238
  %1240 = vrot.lane.b32.xlu0 %v1235, 32
  %v1241 = vpop.permute.xlu0 %1240
  %v1244 = vadd.f32 %v1224, %v1239
  %v1245 = vadd.f32 %v1225, %v1241
  %v1246 = vtanh.pop %v1244
  %v1247 = vtanh.pop %v1245
  %1250 = vrot.lane.b32.xlu0 %v1246, 64
  %v1251 = vpop.permute.xlu0 %1250
  %1252 = vrot.lane.b32.xlu0 %v1247, 64
  %v1253 = vpop.permute.xlu0 %1252
  %v1256 = vmul.f32 %v1206, %v1251
  %v1257 = vmul.f32 %v1221, %v1253
  %s1258 = sadd.s32 %s57, 5
  %v1259 = vstv %s1258
  %vm1260 = vcmp.eq.s32.totalorder %v39, %v1259
  %vm1261 = vcmp.eq.s32.totalorder %v40, %v1259
  %v1262 = vsel %vm1260, 1, 0
  %v1263 = vsel %vm1261, 1, 0
  %1264 = vset.pattern.permute.xlu0 0
  %1265 = vperm.xlu0 %1264, %v1262
  %v1266 = vpop.permute.xlu0 %1265
  %1267 = vset.pattern.permute.xlu0 0
  %1268 = vperm.xlu0 %1267, %v1263
  %v1269 = vpop.permute.xlu0 %1268
  %vm1270 = vcmp.eq.s32.totalorder %v1266, 1
  %vm1271 = vcmp.eq.s32.totalorder %v1269, 1
  %v1272 = vsel %vm1270, %v1256, %v1043
  %v1273 = vsel %vm1271, %v1257, %v1044
  %v1274 = vpack.c.bf16 %v1257, %v1256
  %1276 = vrot.lane.b32.xlu0 %v1274, 32
  %v1277 = vpop.permute.xlu0 %1276
  %v1279 = vsel %vm81, %v1277, 0
  %1281 = vmatpush.bf16.msra.mxu0 0
  %1282 = vmatpush.bf16.msra.mxu0 0
  %1283 = vmatpush.bf16.msra.mxu0 0
  %1284 = vmatpush.bf16.msra.mxu0 0
  %1285 = vmatpush.bf16.msra.mxu0 0
  %1286 = vmatpush.bf16.msra.mxu0 0
  %1287 = vmatpush.bf16.msra.mxu0 %v78
  %1288 = vmatpush.bf16.msra.mxu0 %v77
  %1289 = vmatmul.bf16.gmra.mxu0 %v1279
  %v1290 = vpop.f32.mrf.mxu0
  %v1291 = vadd.f32 0.0, %v1290
  %v1292 = vpop.f32.mrf.mxu0
  %v1293 = vadd.f32 0.0, %v1292
  %1294 = vdwg.mxu0
  %s1295 = scalar_lea.vmem %s0, 40
  %v1296 = vld [vmem:[%s1295] sm:$0xf]
  %v1297 = vld [vmem:[%s1295 + $0x4] sm:$0xf]
  %v1298 = vunpack.c.l.bf16 %v1296
  %v1299 = vunpack.c.l.bf16 %v1297
  %1300 = vmatpush.bf16.msra.mxu0 0
  %1301 = vmatpush.bf16.msra.mxu0 0
  %1302 = vmatpush.bf16.msra.mxu0 0
  %1303 = vmatpush.bf16.msra.mxu0 0
  %1304 = vmatpush.bf16.msra.mxu0 0
  %1305 = vmatpush.bf16.msra.mxu0 0
  %1306 = vmatpush.bf16.msra.mxu0 %v113
  %1307 = vmatpush.bf16.msra.mxu0 %v112
  %1308 = vmatmul.bf16.gmra.mxu0 %v1166
  %v1309 = vpop.f32.mrf.mxu0
  %v1310 = vadd.f32 0.0, %v1309
  %v1311 = vpop.f32.mrf.mxu0
  %v1312 = vadd.f32 0.0, %v1311
  %1313 = vdwg.mxu0
  %v1314 = vadd.f32 %v1298, %v1310
  %v1315 = vadd.f32 %v1299, %v1312
  %v1316 = vxor.u32 %v1314, 2147483648
  %v1317 = vxor.u32 %v1315, 2147483648
  %v1318 = vmul.f32 %v1316, 1.442695
  %v1319 = vpow.pop %v1318
  %v1320 = vmul.f32 %v1317, 1.442695
  %v1321 = vpow.pop %v1320
  %v1322 = vadd.f32 %v1319, 1.0
  %v1323 = vadd.f32 %v1321, 1.0
  %v1324 = vrcp.pop %v1322
  %v1325 = vmul.f32 %v1322, %v1324
  %v1326 = vsub.f32 1.0, %v1325
  %v1327 = vmul.f32 %v1324, %v1326
  %v1328 = vadd.f32 %v1324, %v1327
  %vm1329 = vweird.f32 %v1322
  %vm1330 = vweird.f32 %v1324
  %vm1331 = vmor %vm1329, %vm1330
  %v1332 = vsel %vm1331, %v1324, %v1328
  %v1333 = vand.u32 2147483647, %v1322
  %vm1334 = vcmp.eq.f32.partialorder %v1333, 8.507059e+37
  %v1335 = vand.u32 %v1322, 2147483648
  %v1336 = vor.u32 1.1754944e-38, %v1335
  %v1337 = vsel %vm1334, %v1336, %v1332
  %v1338 = vmul.f32 1.0, %v1337
  %v1339 = vrcp.pop %v1323
  %v1340 = vmul.f32 %v1323, %v1339
  %v1341 = vsub.f32 1.0, %v1340
  %v1342 = vmul.f32 %v1339, %v1341
  %v1343 = vadd.f32 %v1339, %v1342
  %vm1344 = vweird.f32 %v1323
  %vm1345 = vweird.f32 %v1339
  %vm1346 = vmor %vm1344, %vm1345
  %v1347 = vsel %vm1346, %v1339, %v1343
  %v1348 = vand.u32 2147483647, %v1323
  %vm1349 = vcmp.eq.f32.partialorder %v1348, 8.507059e+37
  %v1350 = vand.u32 %v1323, 2147483648
  %v1351 = vor.u32 1.1754944e-38, %v1350
  %v1352 = vsel %vm1349, %v1351, %v1347
  %v1353 = vmul.f32 1.0, %v1352
  %v1354 = vtanh.pop %v1314
  %v1355 = vtanh.pop %v1315
  %v1356 = vmul.f32 %v1338, %v1147
  %v1357 = vmul.f32 %v1353, %v1148
  %1360 = vrot.lane.b32.xlu0 %v1354, 64
  %v1361 = vpop.permute.xlu0 %1360
  %1362 = vrot.lane.b32.xlu0 %v1355, 64
  %v1363 = vpop.permute.xlu0 %1362
  %v1366 = vmul.f32 %v1338, %v1361
  %v1367 = vmul.f32 %v1353, %v1363
  %1370 = vrot.lane.b32.xlu0 %v1366, 32
  %v1371 = vpop.permute.xlu0 %1370
  %1372 = vrot.lane.b32.xlu0 %v1367, 32
  %v1373 = vpop.permute.xlu0 %1372
  %v1376 = vadd.f32 %v1356, %v1371
  %v1377 = vadd.f32 %v1357, %v1373
  %v1378 = vtanh.pop %v1376
  %v1379 = vtanh.pop %v1377
  %1382 = vrot.lane.b32.xlu0 %v1378, 64
  %v1383 = vpop.permute.xlu0 %1382
  %1384 = vrot.lane.b32.xlu0 %v1379, 64
  %v1385 = vpop.permute.xlu0 %1384
  %v1388 = vmul.f32 %v1338, %v1383
  %v1389 = vmul.f32 %v1353, %v1385
  %v1390 = vpack.c.bf16 %v1389, %v1388
  %1392 = vrot.lane.b32.xlu0 %v1390, 32
  %v1393 = vpop.permute.xlu0 %1392
  %v1395 = vsel %vm81, %v1393, 0
  %1397 = vmatpush.bf16.msra.mxu0 0
  %1398 = vmatpush.bf16.msra.mxu0 0
  %1399 = vmatpush.bf16.msra.mxu0 0
  %1400 = vmatpush.bf16.msra.mxu0 0
  %1401 = vmatpush.bf16.msra.mxu0 0
  %1402 = vmatpush.bf16.msra.mxu0 0
  %1403 = vmatpush.bf16.msra.mxu0 %v230
  %1404 = vmatpush.bf16.msra.mxu0 %v229
  %1405 = vmatmul.bf16.gmra.mxu0 %v1395
  %v1406 = vpop.f32.mrf.mxu0
  %v1407 = vadd.f32 %v1291, %v1406
  %v1408 = vpop.f32.mrf.mxu0
  %v1409 = vadd.f32 %v1293, %v1408
  %1410 = vdwg.mxu0
  %v1411 = vadd.f32 %v1407, %v55
  %v1412 = vadd.f32 %v1409, %v55
  %v1413 = vxor.u32 %v1411, 2147483648
  %v1414 = vxor.u32 %v1412, 2147483648
  %v1415 = vmul.f32 %v1413, 1.442695
  %v1416 = vpow.pop %v1415
  %v1417 = vmul.f32 %v1414, 1.442695
  %v1418 = vpow.pop %v1417
  %v1419 = vadd.f32 %v1416, 1.0
  %v1420 = vadd.f32 %v1418, 1.0
  %v1421 = vrcp.pop %v1419
  %v1422 = vmul.f32 %v1419, %v1421
  %v1423 = vsub.f32 1.0, %v1422
  %v1424 = vmul.f32 %v1421, %v1423
  %v1425 = vadd.f32 %v1421, %v1424
  %vm1426 = vweird.f32 %v1419
  %vm1427 = vweird.f32 %v1421
  %vm1428 = vmor %vm1426, %vm1427
  %v1429 = vsel %vm1428, %v1421, %v1425
  %v1430 = vand.u32 2147483647, %v1419
  %vm1431 = vcmp.eq.f32.partialorder %v1430, 8.507059e+37
  %v1432 = vand.u32 %v1419, 2147483648
  %v1433 = vor.u32 1.1754944e-38, %v1432
  %v1434 = vsel %vm1431, %v1433, %v1429
  %v1435 = vmul.f32 1.0, %v1434
  %v1436 = vrcp.pop %v1420
  %v1437 = vmul.f32 %v1420, %v1436
  %v1438 = vsub.f32 1.0, %v1437
  %v1439 = vmul.f32 %v1436, %v1438
  %v1440 = vadd.f32 %v1436, %v1439
  %vm1441 = vweird.f32 %v1420
  %vm1442 = vweird.f32 %v1436
  %vm1443 = vmor %vm1441, %vm1442
  %v1444 = vsel %vm1443, %v1436, %v1440
  %v1445 = vand.u32 2147483647, %v1420
  %vm1446 = vcmp.eq.f32.partialorder %v1445, 8.507059e+37
  %v1447 = vand.u32 %v1420, 2147483648
  %v1448 = vor.u32 1.1754944e-38, %v1447
  %v1449 = vsel %vm1446, %v1448, %v1444
  %v1450 = vmul.f32 1.0, %v1449
  %v1451 = vtanh.pop %v1411
  %v1452 = vtanh.pop %v1412
  %v1453 = vmul.f32 %v1435, %v1244
  %v1454 = vmul.f32 %v1450, %v1245
  %1457 = vrot.lane.b32.xlu0 %v1451, 64
  %v1458 = vpop.permute.xlu0 %1457
  %1459 = vrot.lane.b32.xlu0 %v1452, 64
  %v1460 = vpop.permute.xlu0 %1459
  %v1463 = vmul.f32 %v1435, %v1458
  %v1464 = vmul.f32 %v1450, %v1460
  %1467 = vrot.lane.b32.xlu0 %v1463, 32
  %v1468 = vpop.permute.xlu0 %1467
  %1469 = vrot.lane.b32.xlu0 %v1464, 32
  %v1470 = vpop.permute.xlu0 %1469
  %v1473 = vadd.f32 %v1453, %v1468
  %v1474 = vadd.f32 %v1454, %v1470
  %v1475 = vtanh.pop %v1473
  %v1476 = vtanh.pop %v1474
  %1479 = vrot.lane.b32.xlu0 %v1475, 64
  %v1480 = vpop.permute.xlu0 %1479
  %1481 = vrot.lane.b32.xlu0 %v1476, 64
  %v1482 = vpop.permute.xlu0 %1481
  %v1485 = vmul.f32 %v1435, %v1480
  %v1486 = vmul.f32 %v1450, %v1482
  %s1487 = sadd.s32 %s57, 6
  %v1488 = vstv %s1487
  %vm1489 = vcmp.eq.s32.totalorder %v39, %v1488
  %vm1490 = vcmp.eq.s32.totalorder %v40, %v1488
  %v1491 = vsel %vm1489, 1, 0
  %v1492 = vsel %vm1490, 1, 0
  %1493 = vset.pattern.permute.xlu0 0
  %1494 = vperm.xlu0 %1493, %v1491
  %v1495 = vpop.permute.xlu0 %1494
  %1496 = vset.pattern.permute.xlu0 0
  %1497 = vperm.xlu0 %1496, %v1492
  %v1498 = vpop.permute.xlu0 %1497
  %vm1499 = vcmp.eq.s32.totalorder %v1495, 1
  %vm1500 = vcmp.eq.s32.totalorder %v1498, 1
  %v1501 = vsel %vm1499, %v1485, %v1272
  %v1502 = vsel %vm1500, %v1486, %v1273
  %v1503 = vpack.c.bf16 %v1486, %v1485
  %1505 = vrot.lane.b32.xlu0 %v1503, 32
  %v1506 = vpop.permute.xlu0 %1505
  %v1508 = vsel %vm81, %v1506, 0
  %1510 = vmatpush.bf16.msra.mxu0 0
  %1511 = vmatpush.bf16.msra.mxu0 0
  %1512 = vmatpush.bf16.msra.mxu0 0
  %1513 = vmatpush.bf16.msra.mxu0 0
  %1514 = vmatpush.bf16.msra.mxu0 0
  %1515 = vmatpush.bf16.msra.mxu0 0
  %1516 = vmatpush.bf16.msra.mxu0 %v78
  %1517 = vmatpush.bf16.msra.mxu0 %v77
  %1518 = vmatmul.bf16.gmra.mxu0 %v1508
  %v1519 = vpop.f32.mrf.mxu0
  %v1520 = vadd.f32 0.0, %v1519
  %v1521 = vpop.f32.mrf.mxu0
  %v1522 = vadd.f32 0.0, %v1521
  %1523 = vdwg.mxu0
  %s1524 = scalar_lea.vmem %s0, 48
  %v1525 = vld [vmem:[%s1524] sm:$0xf]
  %v1526 = vld [vmem:[%s1524 + $0x4] sm:$0xf]
  %v1527 = vunpack.c.l.bf16 %v1525
  %v1528 = vunpack.c.l.bf16 %v1526
  %1529 = vmatpush.bf16.msra.mxu0 0
  %1530 = vmatpush.bf16.msra.mxu0 0
  %1531 = vmatpush.bf16.msra.mxu0 0
  %1532 = vmatpush.bf16.msra.mxu0 0
  %1533 = vmatpush.bf16.msra.mxu0 0
  %1534 = vmatpush.bf16.msra.mxu0 0
  %1535 = vmatpush.bf16.msra.mxu0 %v113
  %1536 = vmatpush.bf16.msra.mxu0 %v112
  %1537 = vmatmul.bf16.gmra.mxu0 %v1395
  %v1538 = vpop.f32.mrf.mxu0
  %v1539 = vadd.f32 0.0, %v1538
  %v1540 = vpop.f32.mrf.mxu0
  %v1541 = vadd.f32 0.0, %v1540
  %1542 = vdwg.mxu0
  %v1543 = vadd.f32 %v1527, %v1539
  %v1544 = vadd.f32 %v1528, %v1541
  %v1545 = vxor.u32 %v1543, 2147483648
  %v1546 = vxor.u32 %v1544, 2147483648
  %v1547 = vmul.f32 %v1545, 1.442695
  %v1548 = vpow.pop %v1547
  %v1549 = vmul.f32 %v1546, 1.442695
  %v1550 = vpow.pop %v1549
  %v1551 = vadd.f32 %v1548, 1.0
  %v1552 = vadd.f32 %v1550, 1.0
  %v1553 = vrcp.pop %v1551
  %v1554 = vmul.f32 %v1551, %v1553
  %v1555 = vsub.f32 1.0, %v1554
  %v1556 = vmul.f32 %v1553, %v1555
  %v1557 = vadd.f32 %v1553, %v1556
  %vm1558 = vweird.f32 %v1551
  %vm1559 = vweird.f32 %v1553
  %vm1560 = vmor %vm1558, %vm1559
  %v1561 = vsel %vm1560, %v1553, %v1557
  %v1562 = vand.u32 2147483647, %v1551
  %vm1563 = vcmp.eq.f32.partialorder %v1562, 8.507059e+37
  %v1564 = vand.u32 %v1551, 2147483648
  %v1565 = vor.u32 1.1754944e-38, %v1564
  %v1566 = vsel %vm1563, %v1565, %v1561
  %v1567 = vmul.f32 1.0, %v1566
  %v1568 = vrcp.pop %v1552
  %v1569 = vmul.f32 %v1552, %v1568
  %v1570 = vsub.f32 1.0, %v1569
  %v1571 = vmul.f32 %v1568, %v1570
  %v1572 = vadd.f32 %v1568, %v1571
  %vm1573 = vweird.f32 %v1552
  %vm1574 = vweird.f32 %v1568
  %vm1575 = vmor %vm1573, %vm1574
  %v1576 = vsel %vm1575, %v1568, %v1572
  %v1577 = vand.u32 2147483647, %v1552
  %vm1578 = vcmp.eq.f32.partialorder %v1577, 8.507059e+37
  %v1579 = vand.u32 %v1552, 2147483648
  %v1580 = vor.u32 1.1754944e-38, %v1579
  %v1581 = vsel %vm1578, %v1580, %v1576
  %v1582 = vmul.f32 1.0, %v1581
  %v1583 = vtanh.pop %v1543
  %v1584 = vtanh.pop %v1544
  %v1585 = vmul.f32 %v1567, %v1376
  %v1586 = vmul.f32 %v1582, %v1377
  %1589 = vrot.lane.b32.xlu0 %v1583, 64
  %v1590 = vpop.permute.xlu0 %1589
  %1591 = vrot.lane.b32.xlu0 %v1584, 64
  %v1592 = vpop.permute.xlu0 %1591
  %v1595 = vmul.f32 %v1567, %v1590
  %v1596 = vmul.f32 %v1582, %v1592
  %1599 = vrot.lane.b32.xlu0 %v1595, 32
  %v1600 = vpop.permute.xlu0 %1599
  %1601 = vrot.lane.b32.xlu0 %v1596, 32
  %v1602 = vpop.permute.xlu0 %1601
  %v1605 = vadd.f32 %v1585, %v1600
  %v1606 = vadd.f32 %v1586, %v1602
  %v1607 = vtanh.pop %v1605
  %v1608 = vtanh.pop %v1606
  %1611 = vrot.lane.b32.xlu0 %v1607, 64
  %v1612 = vpop.permute.xlu0 %1611
  %1613 = vrot.lane.b32.xlu0 %v1608, 64
  %v1614 = vpop.permute.xlu0 %1613
  %v1617 = vmul.f32 %v1567, %v1612
  %v1618 = vmul.f32 %v1582, %v1614
  %v1619 = vpack.c.bf16 %v1618, %v1617
  %1621 = vrot.lane.b32.xlu0 %v1619, 32
  %v1622 = vpop.permute.xlu0 %1621
  %v1624 = vsel %vm81, %v1622, 0
  %1626 = vmatpush.bf16.msra.mxu0 0
  %1627 = vmatpush.bf16.msra.mxu0 0
  %1628 = vmatpush.bf16.msra.mxu0 0
  %1629 = vmatpush.bf16.msra.mxu0 0
  %1630 = vmatpush.bf16.msra.mxu0 0
  %1631 = vmatpush.bf16.msra.mxu0 0
  %1632 = vmatpush.bf16.msra.mxu0 %v230
  %1633 = vmatpush.bf16.msra.mxu0 %v229
  %1634 = vmatmul.bf16.gmra.mxu0 %v1624
  %v1635 = vpop.f32.mrf.mxu0
  %v1636 = vadd.f32 %v1520, %v1635
  %v1637 = vpop.f32.mrf.mxu0
  %v1638 = vadd.f32 %v1522, %v1637
  %1639 = vdwg.mxu0
  %v1640 = vadd.f32 %v1636, %v55
  %v1641 = vadd.f32 %v1638, %v55
  %v1642 = vxor.u32 %v1640, 2147483648
  %v1643 = vxor.u32 %v1641, 2147483648
  %v1644 = vmul.f32 %v1642, 1.442695
  %v1645 = vpow.pop %v1644
  %v1646 = vmul.f32 %v1643, 1.442695
  %v1647 = vpow.pop %v1646
  %v1648 = vadd.f32 %v1645, 1.0
  %v1649 = vadd.f32 %v1647, 1.0
  %v1650 = vrcp.pop %v1648
  %v1651 = vmul.f32 %v1648, %v1650
  %v1652 = vsub.f32 1.0, %v1651
  %v1653 = vmul.f32 %v1650, %v1652
  %v1654 = vadd.f32 %v1650, %v1653
  %vm1655 = vweird.f32 %v1648
  %vm1656 = vweird.f32 %v1650
  %vm1657 = vmor %vm1655, %vm1656
  %v1658 = vsel %vm1657, %v1650, %v1654
  %v1659 = vand.u32 2147483647, %v1648
  %vm1660 = vcmp.eq.f32.partialorder %v1659, 8.507059e+37
  %v1661 = vand.u32 %v1648, 2147483648
  %v1662 = vor.u32 1.1754944e-38, %v1661
  %v1663 = vsel %vm1660, %v1662, %v1658
  %v1664 = vmul.f32 1.0, %v1663
  %v1665 = vrcp.pop %v1649
  %v1666 = vmul.f32 %v1649, %v1665
  %v1667 = vsub.f32 1.0, %v1666
  %v1668 = vmul.f32 %v1665, %v1667
  %v1669 = vadd.f32 %v1665, %v1668
  %vm1670 = vweird.f32 %v1649
  %vm1671 = vweird.f32 %v1665
  %vm1672 = vmor %vm1670, %vm1671
  %v1673 = vsel %vm1672, %v1665, %v1669
  %v1674 = vand.u32 2147483647, %v1649
  %vm1675 = vcmp.eq.f32.partialorder %v1674, 8.507059e+37
  %v1676 = vand.u32 %v1649, 2147483648
  %v1677 = vor.u32 1.1754944e-38, %v1676
  %v1678 = vsel %vm1675, %v1677, %v1673
  %v1679 = vmul.f32 1.0, %v1678
  %v1680 = vtanh.pop %v1640
  %v1681 = vtanh.pop %v1641
  %v1682 = vmul.f32 %v1664, %v1473
  %v1683 = vmul.f32 %v1679, %v1474
  %1686 = vrot.lane.b32.xlu0 %v1680, 64
  %v1687 = vpop.permute.xlu0 %1686
  %1688 = vrot.lane.b32.xlu0 %v1681, 64
  %v1689 = vpop.permute.xlu0 %1688
  %v1692 = vmul.f32 %v1664, %v1687
  %v1693 = vmul.f32 %v1679, %v1689
  %1696 = vrot.lane.b32.xlu0 %v1692, 32
  %v1697 = vpop.permute.xlu0 %1696
  %1698 = vrot.lane.b32.xlu0 %v1693, 32
  %v1699 = vpop.permute.xlu0 %1698
  %v1702 = vadd.f32 %v1682, %v1697
  %v1703 = vadd.f32 %v1683, %v1699
  %v1704 = vtanh.pop %v1702
  %v1705 = vtanh.pop %v1703
  %1708 = vrot.lane.b32.xlu0 %v1704, 64
  %v1709 = vpop.permute.xlu0 %1708
  %1710 = vrot.lane.b32.xlu0 %v1705, 64
  %v1711 = vpop.permute.xlu0 %1710
  %v1714 = vmul.f32 %v1664, %v1709
  %v1715 = vmul.f32 %v1679, %v1711
  %s1716 = sadd.s32 %s57, 7
  %v1717 = vstv %s1716
  %vm1718 = vcmp.eq.s32.totalorder %v39, %v1717
  %vm1719 = vcmp.eq.s32.totalorder %v40, %v1717
  %v1720 = vsel %vm1718, 1, 0
  %v1721 = vsel %vm1719, 1, 0
  %1722 = vset.pattern.permute.xlu0 0
  %1723 = vperm.xlu0 %1722, %v1720
  %v1724 = vpop.permute.xlu0 %1723
  %1725 = vset.pattern.permute.xlu0 0
  %1726 = vperm.xlu0 %1725, %v1721
  %v1727 = vpop.permute.xlu0 %1726
  %vm1728 = vcmp.eq.s32.totalorder %v1724, 1
  %vm1729 = vcmp.eq.s32.totalorder %v1727, 1
  %v1730 = vsel %vm1728, %v1714, %v1501
  %v1731 = vsel %vm1729, %v1715, %v1502
  %v1732 = vpack.c.bf16 %v1715, %v1714
  %1734 = vrot.lane.b32.xlu0 %v1732, 32
  %v1735 = vpop.permute.xlu0 %1734
  %v1737 = vsel %vm81, %v1735, 0
  %1739 = vmatpush.bf16.msra.mxu0 0
  %1740 = vmatpush.bf16.msra.mxu0 0
  %1741 = vmatpush.bf16.msra.mxu0 0
  %1742 = vmatpush.bf16.msra.mxu0 0
  %1743 = vmatpush.bf16.msra.mxu0 0
  %1744 = vmatpush.bf16.msra.mxu0 0
  %1745 = vmatpush.bf16.msra.mxu0 %v78
  %1746 = vmatpush.bf16.msra.mxu0 %v77
  %1747 = vmatmul.bf16.gmra.mxu0 %v1737
  %v1748 = vpop.f32.mrf.mxu0
  %v1749 = vadd.f32 0.0, %v1748
  %v1750 = vpop.f32.mrf.mxu0
  %v1751 = vadd.f32 0.0, %v1750
  %1752 = vdwg.mxu0
  %s1753 = scalar_lea.vmem %s0, 56
  %v1754 = vld [vmem:[%s1753] sm:$0xf]
  %v1755 = vld [vmem:[%s1753 + $0x4] sm:$0xf]
  %v1756 = vunpack.c.l.bf16 %v1754
  %v1757 = vunpack.c.l.bf16 %v1755
  %1758 = vmatpush.bf16.msra.mxu0 0
  %1759 = vmatpush.bf16.msra.mxu0 0
  %1760 = vmatpush.bf16.msra.mxu0 0
  %1761 = vmatpush.bf16.msra.mxu0 0
  %1762 = vmatpush.bf16.msra.mxu0 0
  %1763 = vmatpush.bf16.msra.mxu0 0
  %1764 = vmatpush.bf16.msra.mxu0 %v113
  %1765 = vmatpush.bf16.msra.mxu0 %v112
  %1766 = vmatmul.bf16.gmra.mxu0 %v1624
  %v1767 = vpop.f32.mrf.mxu0
  %v1768 = vadd.f32 0.0, %v1767
  %v1769 = vpop.f32.mrf.mxu0
  %v1770 = vadd.f32 0.0, %v1769
  %1771 = vdwg.mxu0
  %v1772 = vadd.f32 %v1756, %v1768
  %v1773 = vadd.f32 %v1757, %v1770
  %v1774 = vxor.u32 %v1772, 2147483648
  %v1775 = vxor.u32 %v1773, 2147483648
  %v1776 = vmul.f32 %v1774, 1.442695
  %v1777 = vpow.pop %v1776
  %v1778 = vmul.f32 %v1775, 1.442695
  %v1779 = vpow.pop %v1778
  %v1780 = vadd.f32 %v1777, 1.0
  %v1781 = vadd.f32 %v1779, 1.0
  %v1782 = vrcp.pop %v1780
  %v1783 = vmul.f32 %v1780, %v1782
  %v1784 = vsub.f32 1.0, %v1783
  %v1785 = vmul.f32 %v1782, %v1784
  %v1786 = vadd.f32 %v1782, %v1785
  %vm1787 = vweird.f32 %v1780
  %vm1788 = vweird.f32 %v1782
  %vm1789 = vmor %vm1787, %vm1788
  %v1790 = vsel %vm1789, %v1782, %v1786
  %v1791 = vand.u32 2147483647, %v1780
  %vm1792 = vcmp.eq.f32.partialorder %v1791, 8.507059e+37
  %v1793 = vand.u32 %v1780, 2147483648
  %v1794 = vor.u32 1.1754944e-38, %v1793
  %v1795 = vsel %vm1792, %v1794, %v1790
  %v1796 = vmul.f32 1.0, %v1795
  %v1797 = vrcp.pop %v1781
  %v1798 = vmul.f32 %v1781, %v1797
  %v1799 = vsub.f32 1.0, %v1798
  %v1800 = vmul.f32 %v1797, %v1799
  %v1801 = vadd.f32 %v1797, %v1800
  %vm1802 = vweird.f32 %v1781
  %vm1803 = vweird.f32 %v1797
  %vm1804 = vmor %vm1802, %vm1803
  %v1805 = vsel %vm1804, %v1797, %v1801
  %v1806 = vand.u32 2147483647, %v1781
  %vm1807 = vcmp.eq.f32.partialorder %v1806, 8.507059e+37
  %v1808 = vand.u32 %v1781, 2147483648
  %v1809 = vor.u32 1.1754944e-38, %v1808
  %v1810 = vsel %vm1807, %v1809, %v1805
  %v1811 = vmul.f32 1.0, %v1810
  %v1812 = vtanh.pop %v1772
  %v1813 = vtanh.pop %v1773
  %v1814 = vmul.f32 %v1796, %v1605
  %v1815 = vmul.f32 %v1811, %v1606
  %1818 = vrot.lane.b32.xlu0 %v1812, 64
  %v1819 = vpop.permute.xlu0 %1818
  %1820 = vrot.lane.b32.xlu0 %v1813, 64
  %v1821 = vpop.permute.xlu0 %1820
  %v1824 = vmul.f32 %v1796, %v1819
  %v1825 = vmul.f32 %v1811, %v1821
  %1828 = vrot.lane.b32.xlu0 %v1824, 32
  %v1829 = vpop.permute.xlu0 %1828
  %1830 = vrot.lane.b32.xlu0 %v1825, 32
  %v1831 = vpop.permute.xlu0 %1830
  %v1834 = vadd.f32 %v1814, %v1829
  %v1835 = vadd.f32 %v1815, %v1831
  %v1836 = vtanh.pop %v1834
  %v1837 = vtanh.pop %v1835
  %1840 = vrot.lane.b32.xlu0 %v1836, 64
  %v1841 = vpop.permute.xlu0 %1840
  %1842 = vrot.lane.b32.xlu0 %v1837, 64
  %v1843 = vpop.permute.xlu0 %1842
  %v1846 = vmul.f32 %v1796, %v1841
  %v1847 = vmul.f32 %v1811, %v1843
  %v1848 = vpack.c.bf16 %v1847, %v1846
  %1850 = vrot.lane.b32.xlu0 %v1848, 32
  %v1851 = vpop.permute.xlu0 %1850
  %v1853 = vsel %vm81, %v1851, 0
  %1855 = vmatpush.bf16.msra.mxu0 0
  %1856 = vmatpush.bf16.msra.mxu0 0
  %1857 = vmatpush.bf16.msra.mxu0 0
  %1858 = vmatpush.bf16.msra.mxu0 0
  %1859 = vmatpush.bf16.msra.mxu0 0
  %1860 = vmatpush.bf16.msra.mxu0 0
  %1861 = vmatpush.bf16.msra.mxu0 %v230
  %1862 = vmatpush.bf16.msra.mxu0 %v229
  %1863 = vmatmul.bf16.gmra.mxu0 %v1853
  %v1864 = vpop.f32.mrf.mxu0
  %v1865 = vadd.f32 %v1749, %v1864
  %v1866 = vpop.f32.mrf.mxu0
  %v1867 = vadd.f32 %v1751, %v1866
  %1868 = vdwg.mxu0
  %v1869 = vadd.f32 %v1865, %v55
  %v1870 = vadd.f32 %v1867, %v55
  %v1871 = vxor.u32 %v1869, 2147483648
  %v1872 = vxor.u32 %v1870, 2147483648
  %v1873 = vmul.f32 %v1871, 1.442695
  %v1874 = vpow.pop %v1873
  %v1875 = vmul.f32 %v1872, 1.442695
  %v1876 = vpow.pop %v1875
  %v1877 = vadd.f32 %v1874, 1.0
  %v1878 = vadd.f32 %v1876, 1.0
  %v1879 = vrcp.pop %v1877
  %v1880 = vmul.f32 %v1877, %v1879
  %v1881 = vsub.f32 1.0, %v1880
  %v1882 = vmul.f32 %v1879, %v1881
  %v1883 = vadd.f32 %v1879, %v1882
  %vm1884 = vweird.f32 %v1877
  %vm1885 = vweird.f32 %v1879
  %vm1886 = vmor %vm1884, %vm1885
  %v1887 = vsel %vm1886, %v1879, %v1883
  %v1888 = vand.u32 2147483647, %v1877
  %vm1889 = vcmp.eq.f32.partialorder %v1888, 8.507059e+37
  %v1890 = vand.u32 %v1877, 2147483648
  %v1891 = vor.u32 1.1754944e-38, %v1890
  %v1892 = vsel %vm1889, %v1891, %v1887
  %v1893 = vmul.f32 1.0, %v1892
  %v1894 = vrcp.pop %v1878
  %v1895 = vmul.f32 %v1878, %v1894
  %v1896 = vsub.f32 1.0, %v1895
  %v1897 = vmul.f32 %v1894, %v1896
  %v1898 = vadd.f32 %v1894, %v1897
  %vm1899 = vweird.f32 %v1878
  %vm1900 = vweird.f32 %v1894
  %vm1901 = vmor %vm1899, %vm1900
  %v1902 = vsel %vm1901, %v1894, %v1898
  %v1903 = vand.u32 2147483647, %v1878
  %vm1904 = vcmp.eq.f32.partialorder %v1903, 8.507059e+37
  %v1905 = vand.u32 %v1878, 2147483648
  %v1906 = vor.u32 1.1754944e-38, %v1905
  %v1907 = vsel %vm1904, %v1906, %v1902
  %v1908 = vmul.f32 1.0, %v1907
  %v1909 = vtanh.pop %v1869
  %v1910 = vtanh.pop %v1870
  %v1911 = vmul.f32 %v1893, %v1702
  %v1912 = vmul.f32 %v1908, %v1703
  %1915 = vrot.lane.b32.xlu0 %v1909, 64
  %v1916 = vpop.permute.xlu0 %1915
  %1917 = vrot.lane.b32.xlu0 %v1910, 64
  %v1918 = vpop.permute.xlu0 %1917
  %v1921 = vmul.f32 %v1893, %v1916
  %v1922 = vmul.f32 %v1908, %v1918
  %1925 = vrot.lane.b32.xlu0 %v1921, 32
  %v1926 = vpop.permute.xlu0 %1925
  %1927 = vrot.lane.b32.xlu0 %v1922, 32
  %v1928 = vpop.permute.xlu0 %1927
  %v1931 = vadd.f32 %v1911, %v1926
  %v1932 = vadd.f32 %v1912, %v1928
  %v1933 = vtanh.pop %v1931
  %v1934 = vtanh.pop %v1932
  %1937 = vrot.lane.b32.xlu0 %v1933, 64
  %v1938 = vpop.permute.xlu0 %1937
  %1939 = vrot.lane.b32.xlu0 %v1934, 64
  %v1940 = vpop.permute.xlu0 %1939
  %v1943 = vmul.f32 %v1893, %v1938
  %v1944 = vmul.f32 %v1908, %v1940
  %s1945 = sadd.s32 %s57, 8
  %v1946 = vstv %s1945
  %vm1947 = vcmp.eq.s32.totalorder %v39, %v1946
  %vm1948 = vcmp.eq.s32.totalorder %v40, %v1946
  %v1949 = vsel %vm1947, 1, 0
  %v1950 = vsel %vm1948, 1, 0
  %1951 = vset.pattern.permute.xlu0 0
  %1952 = vperm.xlu0 %1951, %v1949
  %v1953 = vpop.permute.xlu0 %1952
  %1954 = vset.pattern.permute.xlu0 0
  %1955 = vperm.xlu0 %1954, %v1950
  %v1956 = vpop.permute.xlu0 %1955
  %vm1957 = vcmp.eq.s32.totalorder %v1953, 1
  %vm1958 = vcmp.eq.s32.totalorder %v1956, 1
  %v1959 = vsel %vm1957, %v1943, %v1730
  %v1960 = vsel %vm1958, %v1944, %v1731
  %1963 = vrot.lane.b32.xlu0 %v1846, 32
  %v1964 = vpop.permute.xlu0 %1963
  %1965 = vrot.lane.b32.xlu0 %v1847, 32
  %v1966 = vpop.permute.xlu0 %1965
  %1969 = vst.msk [vmem:[#allocation2] sm:$0xff] %vm81, %v1964
  %1970 = vst.msk [vmem:[#allocation2 + $0x8] sm:$0xff] %vm81, %v1966
  %1973 = vrot.lane.b32.xlu0 %v1834, 96
  %v1974 = vpop.permute.xlu0 %1973
  %1975 = vrot.lane.b32.xlu0 %v1835, 96
  %v1976 = vpop.permute.xlu0 %1975
  %1979 = vst.msk [vmem:[#allocation3] sm:$0xff] %vm81, %v1974
  %1980 = vst.msk [vmem:[#allocation3 + $0x8] sm:$0xff] %vm81, %v1976
  %1983 = vrot.lane.b32.xlu0 %v1943, 32
  %v1984 = vpop.permute.xlu0 %1983
  %1985 = vrot.lane.b32.xlu0 %v1944, 32
  %v1986 = vpop.permute.xlu0 %1985
  %1989 = vst.msk [vmem:[#allocation4] sm:$0xff] %vm81, %v1984
  %1990 = vst.msk [vmem:[#allocation4 + $0x8] sm:$0xff] %vm81, %v1986
  %1993 = vrot.lane.b32.xlu0 %v1931, 96
  %v1994 = vpop.permute.xlu0 %1993
  %1995 = vrot.lane.b32.xlu0 %v1932, 96
  %v1996 = vpop.permute.xlu0 %1995
  %1999 = vst.msk [vmem:[#allocation5] sm:$0xff] %vm81, %v1994
  %2000 = vst.msk [vmem:[#allocation5 + $0x8] sm:$0xff] %vm81, %v1996
  %2003 = vrot.lane.b32.xlu0 %v1959, 32
  %v2004 = vpop.permute.xlu0 %2003
  %2005 = vrot.lane.b32.xlu0 %v1960, 32
  %v2006 = vpop.permute.xlu0 %2005
  %2009 = vst.msk [vmem:[%s6] sm:$0xff] %vm81, %v2004
  %2010 = vst.msk [vmem:[%s6 + $0x8] sm:$0xff] %vm81, %v2006
  // Predicated region
  $region30: #{lstm_packed_forward.1} parent=0 // pred_check
    _
  $region31: #{lstm_packed_forward.1} parent=0 // pred_check_branch
    %2012 = sbr.rel (0) target = $region33
  $region32: #{lstm_packed_forward.1} parent=0 // pred_region
    _
  $region33: #{lstm_packed_forward.1} parent=0 // pred_fallthru
    _
  // Predicated region
  $region34: #{lstm_packed_forward.1} parent=0 // pred_check
    _
  $region35: #{lstm_packed_forward.1} parent=0 // pred_check_branch
    %2014 = sbr.rel (0) target = $region37
  $region36: #{lstm_packed_forward.1} parent=0 // pred_region
    _
  $region37: #{lstm_packed_forward.1} parent=0 // pred_fallthru
    _

</llo_original>
